<compile_context>
chip_gen: v7x
topology: tpu7x:2x2x1
jax: 0.10.0
libtpu: 0.0.40
codegen_flags: <defaults>
</compile_context>

<pallas_src>
import functools

import jax
import jax.numpy as jnp
from jax.experimental import pallas as pl
from jax.experimental.pallas import tpu as pltpu

# ---- synthetic "bert.config" (small, deterministic) ----
VOCAB = 100
MAX_POS = 32
HIDDEN = 32
N_LAYERS = 2
N_HEADS = 2
HEAD_DIM = HIDDEN // N_HEADS
INTER = 64
TAGSET = 5
TAG_PAD = 128          # lane-dense padded tag-head width
LN_EPS = 1e-12


# ----------------------------- fused encoder kernel -----------------------------

def bert_encoder_kernel(
    # inputs (grid axis = layer index; weights stacked on leading layer dim)
    x_emb_ref, mask_ref, emb_g_ref, emb_b_ref,
    wqkv_ref, bqkv_ref, wo_ref, bo_ref, ln1g_ref, ln1b_ref,
    wi_ref, bi_ref, wf_ref, bf_ref, ln2g_ref, ln2b_ref,
    wtag_ref, btag_ref,
    # output
    out_ref,
    # scratch: residual stream, persistent across the layer grid axis
    x_vmem,
    *, batch, seq, scale,
):
    l = pl.program_id(0)
    m = batch * seq

    def layernorm(y, g, b):
        mean = jnp.mean(y, axis=-1, keepdims=True)
        cen = y - mean
        var = jnp.mean(cen * cen, axis=-1, keepdims=True)
        return cen * jax.lax.rsqrt(var + LN_EPS) * g + b

    # ---- embedding LayerNorm, first grid step only (no zeros-residual DMA) ----
    @pl.when(l == 0)
    def _():
        x_vmem[...] = layernorm(x_emb_ref[...], emb_g_ref[...], emb_b_ref[...])

    x = x_vmem[...]                               # (M, H) f32 residual stream
    x_bf = x.astype(jnp.bfloat16)

    # ---- fused QKV projection: one (M, H) @ (H, 3H) bf16 matmul ----
    qkv = (jnp.dot(x_bf, wqkv_ref[0], preferred_element_type=jnp.float32)
           + bqkv_ref[0])                         # (M, 3H) f32

    mask = mask_ref[...]                          # (B, S) additive key mask

    # ---- self-attention: heads are contiguous HEAD_DIM chunks of the lane axis ----
    attn = jnp.zeros((m, HIDDEN), jnp.float32)
    for h in range(N_HEADS):
        qh = qkv[:, h * HEAD_DIM:(h + 1) * HEAD_DIM].reshape(batch, seq, HEAD_DIM)
        kh = qkv[:, HIDDEN + h * HEAD_DIM:HIDDEN + (h + 1) * HEAD_DIM].reshape(
            batch, seq, HEAD_DIM)
        vh = qkv[:, 2 * HIDDEN + h * HEAD_DIM:2 * HIDDEN + (h + 1) * HEAD_DIM].reshape(
            batch, seq, HEAD_DIM)

        s = jnp.einsum('bqd,bkd->bqk',
                       qh.astype(jnp.bfloat16), kh.astype(jnp.bfloat16),
                       preferred_element_type=jnp.float32) * scale
        s = s + mask[:, None, :]
        s = s - jnp.max(s, axis=-1, keepdims=True)
        p = jnp.exp(s)
        p = p * pl.reciprocal(jnp.sum(p, axis=-1, keepdims=True), approx=True)
        ctx = jnp.einsum('bqk,bkd->bqd',
                         p.astype(jnp.bfloat16), vh.astype(jnp.bfloat16),
                         preferred_element_type=jnp.float32)      # (B, S, HD)

        # accumulate the per-head slice of the output projection
        # (avoids concatenating head contexts along the lane axis)
        attn = attn + jnp.dot(ctx.reshape(m, HEAD_DIM).astype(jnp.bfloat16),
                              wo_ref[0, h],
                              preferred_element_type=jnp.float32)

    x = layernorm(attn + bo_ref[0] + x, ln1g_ref[0], ln1b_ref[0])

    # ---- feed-forward: matmul + bias + GELU fused ----
    y = (jnp.dot(x.astype(jnp.bfloat16), wi_ref[0],
                 preferred_element_type=jnp.float32) + bi_ref[0])  # (M, INTER)
    # TODO(synk): HF BERT uses exact erf-GELU; tanh approximation used here.
    y = 0.5 * y * (1.0 + jnp.tanh(0.7978845608028654 * (y + 0.044715 * y * y * y)))
    ffn = (jnp.dot(y.astype(jnp.bfloat16), wf_ref[0],
                   preferred_element_type=jnp.float32) + bf_ref[0])  # (M, H)
    x = layernorm(ffn + x, ln2g_ref[0], ln2b_ref[0])

    x_vmem[...] = x

    # ---- hidden2tag head on the final layer (lane-dense 128-wide output) ----
    @pl.when(l == pl.num_programs(0) - 1)
    def _():
        out_ref[...] = (jnp.dot(x.astype(jnp.bfloat16), wtag_ref[...],
                                preferred_element_type=jnp.float32)
                        + btag_ref[...])


# ----------------------------- parameters (pre-packed for the fused kernel) -----------------------------

def init_params(key):
    keys = jax.random.split(key, 64)
    it = iter(keys)

    def nrm(shape, scale=0.02):
        return (scale * jax.random.normal(next(it), shape)).astype(jnp.float32)

    wqkv, bqkv, wo_h, bo = [], [], [], []
    ln1_g, ln1_b, ln2_g, ln2_b = [], [], [], []
    wi, bi, wf, bf = [], [], [], []
    for _ in range(N_LAYERS):
        wq = nrm((HIDDEN, HIDDEN))
        wk = nrm((HIDDEN, HIDDEN))
        wv = nrm((HIDDEN, HIDDEN))
        wqkv.append(jnp.concatenate([wq, wk, wv], axis=1))        # (H, 3H)
        bqkv.append(jnp.zeros((1, 3 * HIDDEN), jnp.float32))
        wo = nrm((HIDDEN, HIDDEN))
        wo_h.append(wo.reshape(N_HEADS, HEAD_DIM, HIDDEN))        # per-head row split
        bo.append(jnp.zeros((1, HIDDEN), jnp.float32))
        ln1_g.append(jnp.ones((1, HIDDEN), jnp.float32))
        ln1_b.append(jnp.zeros((1, HIDDEN), jnp.float32))
        wi.append(nrm((HIDDEN, INTER)))
        bi.append(jnp.zeros((1, INTER), jnp.float32))
        wf.append(nrm((INTER, HIDDEN)))
        bf.append(jnp.zeros((1, HIDDEN), jnp.float32))
        ln2_g.append(jnp.ones((1, HIDDEN), jnp.float32))
        ln2_b.append(jnp.zeros((1, HIDDEN), jnp.float32))

    wtag = nrm((HIDDEN, TAGSET))
    wtag_pad = jnp.zeros((HIDDEN, TAG_PAD), jnp.float32).at[:, :TAGSET].set(wtag)
    btag_pad = jnp.zeros((1, TAG_PAD), jnp.float32)

    return {
        "word_emb": nrm((VOCAB, HIDDEN)),
        "pos_emb": nrm((MAX_POS, HIDDEN)),
        "type_emb": nrm((2, HIDDEN)),
        "emb_ln_g": jnp.ones((1, HIDDEN), jnp.float32),
        "emb_ln_b": jnp.zeros((1, HIDDEN), jnp.float32),
        # MXU operands stored bf16 (f32 accumulation in-kernel); biases/LN f32.
        "wqkv": jnp.stack(wqkv).astype(jnp.bfloat16),   # (L, H, 3H)
        "bqkv": jnp.stack(bqkv),                        # (L, 1, 3H)
        "wo_h": jnp.stack(wo_h).astype(jnp.bfloat16),   # (L, NH, HD, H)
        "bo": jnp.stack(bo),                            # (L, 1, H)
        "ln1_g": jnp.stack(ln1_g), "ln1_b": jnp.stack(ln1_b),
        "wi": jnp.stack(wi).astype(jnp.bfloat16),       # (L, H, INTER)
        "bi": jnp.stack(bi),                            # (L, 1, INTER)
        "wf": jnp.stack(wf).astype(jnp.bfloat16),       # (L, INTER, H)
        "bf": jnp.stack(bf),                            # (L, 1, H)
        "ln2_g": jnp.stack(ln2_g), "ln2_b": jnp.stack(ln2_b),
        "wtag_pad": wtag_pad.astype(jnp.bfloat16),      # (H, 128) lane-dense
        "btag_pad": btag_pad,                           # (1, 128)
    }


# ----------------------------- forward pass -----------------------------

def bert_pos_tagger_forward(params, input_ids, attention_mask):
    B, S = input_ids.shape
    M = B * S

    # TODO(synk): embedding row-gather left in plain JAX (no clean small-scale
    # Pallas gather); everything after it runs in one fused pallas_call.
    x_emb = (
        params["word_emb"][input_ids]
        + params["pos_emb"][jnp.arange(S)][None, :, :]
        + params["type_emb"][0][None, None, :]
    ).astype(jnp.float32).reshape(M, HIDDEN)

    # additive key mask (B, S); broadcast over heads/queries inside the kernel
    mask_add = (1.0 - attention_mask.astype(jnp.float32)) * -1e9

    kernel = functools.partial(
        bert_encoder_kernel, batch=B, seq=S, scale=1.0 / (HEAD_DIM ** 0.5))

    layer = lambda l: (l, 0, 0)
    const2 = lambda l: (0, 0)

    grid_spec = pltpu.PrefetchScalarGridSpec(
        num_scalar_prefetch=0,
        grid=(N_LAYERS,),
        in_specs=[
            pl.BlockSpec((M, HIDDEN), const2),                         # x_emb
            pl.BlockSpec((B, S), const2),                              # mask_add
            pl.BlockSpec((1, HIDDEN), const2),                         # emb_ln_g
            pl.BlockSpec((1, HIDDEN), const2),                         # emb_ln_b
            pl.BlockSpec((1, HIDDEN, 3 * HIDDEN), layer),              # wqkv
            pl.BlockSpec((1, 1, 3 * HIDDEN), layer),                   # bqkv
            pl.BlockSpec((1, N_HEADS, HEAD_DIM, HIDDEN),
                         lambda l: (l, 0, 0, 0)),                      # wo (per head)
            pl.BlockSpec((1, 1, HIDDEN), layer),                       # bo
            pl.BlockSpec((1, 1, HIDDEN), layer),                       # ln1_g
            pl.BlockSpec((1, 1, HIDDEN), layer),                       # ln1_b
            pl.BlockSpec((1, HIDDEN, INTER), layer),                   # wi
            pl.BlockSpec((1, 1, INTER), layer),                        # bi
            pl.BlockSpec((1, INTER, HIDDEN), layer),                   # wf
            pl.BlockSpec((1, 1, HIDDEN), layer),                       # bf
            pl.BlockSpec((1, 1, HIDDEN), layer),                       # ln2_g
            pl.BlockSpec((1, 1, HIDDEN), layer),                       # ln2_b
            pl.BlockSpec((HIDDEN, TAG_PAD), const2),                   # wtag (padded)
            pl.BlockSpec((1, TAG_PAD), const2),                        # btag (padded)
        ],
        out_specs=pl.BlockSpec((M, TAG_PAD), const2),
        scratch_shapes=[pltpu.VMEM((M, HIDDEN), jnp.float32)],
    )

    tag_padded = pl.pallas_call(
        kernel,
        out_shape=jax.ShapeDtypeStruct((M, TAG_PAD), jnp.float32),
        grid_spec=grid_spec,
        compiler_params=pltpu.CompilerParams(
            dimension_semantics=("arbitrary",)),   # layer axis is sequential
    )(
        x_emb, mask_add,
        params["emb_ln_g"], params["emb_ln_b"],
        params["wqkv"], params["bqkv"], params["wo_h"], params["bo"],
        params["ln1_g"], params["ln1_b"],
        params["wi"], params["bi"], params["wf"], params["bf"],
        params["ln2_g"], params["ln2_b"],
        params["wtag_pad"], params["btag_pad"],
    )

    # slice the lane-dense padded head back to TAGSET
    return tag_padded[:, :TAGSET].reshape(B, S, TAGSET)


# ----------------------------- main -----------------------------

if __name__ == "__main__":
    key = jax.random.PRNGKey(0)
    kp, kid = jax.random.split(key)

    B, S = 2, 8
    params = init_params(kp)

    input_ids = jax.random.randint(kid, (B, S), 0, VOCAB, dtype=jnp.int32)
    attention_mask = jnp.ones((B, S), dtype=jnp.int32)
    attention_mask = attention_mask.at[1, 6:].set(0)  # some padding on seq 1

    fwd = jax.jit(bert_pos_tagger_forward)
    tag_scores = fwd(params, input_ids, attention_mask)
    jax.block_until_ready(tag_scores)

    assert tag_scores.shape == (B, S, TAGSET)
    assert tag_scores.dtype == jnp.float32
    assert bool(jnp.all(jnp.isfinite(tag_scores)))
    print("KERNEL_OK")
</pallas_src>

<mosaic_0001>
module attributes {stable_mosaic.version = 11 : i64} {
  func.func @bert_encoder_kernel(%arg0: i32, %arg1: memref<16x32xf32, #tpu.memory_space<vmem>>, %arg2: memref<2x8xf32, #tpu.memory_space<vmem>>, %arg3: memref<1x32xf32, #tpu.memory_space<vmem>>, %arg4: memref<1x32xf32, #tpu.memory_space<vmem>>, %arg5: memref<1x32x96xbf16, #tpu.memory_space<vmem>>, %arg6: memref<1x1x96xf32, #tpu.memory_space<vmem>>, %arg7: memref<1x2x16x32xbf16, #tpu.memory_space<vmem>>, %arg8: memref<1x1x32xf32, #tpu.memory_space<vmem>>, %arg9: memref<1x1x32xf32, #tpu.memory_space<vmem>>, %arg10: memref<1x1x32xf32, #tpu.memory_space<vmem>>, %arg11: memref<1x32x64xbf16, #tpu.memory_space<vmem>>, %arg12: memref<1x1x64xf32, #tpu.memory_space<vmem>>, %arg13: memref<1x64x32xbf16, #tpu.memory_space<vmem>>, %arg14: memref<1x1x32xf32, #tpu.memory_space<vmem>>, %arg15: memref<1x1x32xf32, #tpu.memory_space<vmem>>, %arg16: memref<1x1x32xf32, #tpu.memory_space<vmem>>, %arg17: memref<32x128xbf16, #tpu.memory_space<vmem>>, %arg18: memref<1x128xf32, #tpu.memory_space<vmem>>, %arg19: memref<16x128xf32, #tpu.memory_space<vmem>>, %arg20: memref<16x32xf32, #tpu.memory_space<vmem>>) attributes {dimension_semantics = [#tpu.dimension_semantics<arbitrary>], iteration_bounds = array<i64: 2>, scalar_prefetch = 0 : i64, scratch_operands = 1 : i64, tpu.core_type = #tpu.core_type<tc>, window_params = [{pipeline_mode = #tpu.pipeline_mode<synchronous>, transform_indices = @transform_0, window_bounds = array<i64: 16, 32>}, {pipeline_mode = #tpu.pipeline_mode<synchronous>, transform_indices = @transform_1, window_bounds = array<i64: 2, 8>}, {pipeline_mode = #tpu.pipeline_mode<synchronous>, transform_indices = @transform_2, window_bounds = array<i64: 1, 32>}, {pipeline_mode = #tpu.pipeline_mode<synchronous>, transform_indices = @transform_3, window_bounds = array<i64: 1, 32>}, {transform_indices = @transform_4, window_bounds = array<i64: 1, 32, 96>}, {transform_indices = @transform_5, window_bounds = array<i64: 1, 1, 96>}, {transform_indices = @transform_6, window_bounds = array<i64: 1, 2, 16, 32>}, {transform_indices = @transform_7, window_bounds = array<i64: 1, 1, 32>}, {transform_indices = @transform_8, window_bounds = array<i64: 1, 1, 32>}, {transform_indices = @transform_9, window_bounds = array<i64: 1, 1, 32>}, {transform_indices = @transform_10, window_bounds = array<i64: 1, 32, 64>}, {transform_indices = @transform_11, window_bounds = array<i64: 1, 1, 64>}, {transform_indices = @transform_12, window_bounds = array<i64: 1, 64, 32>}, {transform_indices = @transform_13, window_bounds = array<i64: 1, 1, 32>}, {transform_indices = @transform_14, window_bounds = array<i64: 1, 1, 32>}, {transform_indices = @transform_15, window_bounds = array<i64: 1, 1, 32>}, {pipeline_mode = #tpu.pipeline_mode<synchronous>, transform_indices = @transform_16, window_bounds = array<i64: 32, 128>}, {pipeline_mode = #tpu.pipeline_mode<synchronous>, transform_indices = @transform_17, window_bounds = array<i64: 1, 128>}, {pipeline_mode = #tpu.pipeline_mode<synchronous>, transform_indices = @transform_18, window_bounds = array<i64: 16, 128>}]} {
    %c0_i32 = arith.constant 0 : i32
    %0 = arith.cmpi eq, %arg0, %c0_i32 : i32
    %1 = arith.extui %0 : i1 to i32
    %c0_i32_0 = arith.constant 0 : i32
    %2 = arith.cmpi ne, %1, %c0_i32_0 : i32
    scf.if %2 {
      %c0_76 = arith.constant 0 : index
      %c0_77 = arith.constant 0 : index
      %167 = vector.load %arg1[%c0_76, %c0_77] : memref<16x32xf32, #tpu.memory_space<vmem>>, vector<16x32xf32>
      %c0_78 = arith.constant 0 : index
      %c0_79 = arith.constant 0 : index
      %168 = vector.load %arg3[%c0_78, %c0_79] : memref<1x32xf32, #tpu.memory_space<vmem>>, vector<1x32xf32>
      %c0_80 = arith.constant 0 : index
      %c0_81 = arith.constant 0 : index
      %169 = vector.load %arg4[%c0_80, %c0_81] : memref<1x32xf32, #tpu.memory_space<vmem>>, vector<1x32xf32>
      %cst_82 = arith.constant dense<0.000000e+00> : vector<16xf32>
      %170 = vector.multi_reduction <add>, %167, %cst_82 [1] : vector<16x32xf32> to vector<16xf32>
      %171 = vector.shape_cast %170 : vector<16xf32> to vector<16x1xf32>
      %cst_83 = arith.constant 3.200000e+01 : f32
      %172 = vector.broadcast %cst_83 : f32 to vector<16x1xf32>
      %173 = arith.divf %171, %172 : vector<16x1xf32>
      %174 = vector.broadcast %173 : vector<16x1xf32> to vector<16x32xf32>
      %175 = arith.subf %167, %174 : vector<16x32xf32>
      %176 = arith.mulf %175, %175 : vector<16x32xf32>
      %cst_84 = arith.constant dense<0.000000e+00> : vector<16xf32>
      %177 = vector.multi_reduction <add>, %176, %cst_84 [1] : vector<16x32xf32> to vector<16xf32>
      %178 = vector.shape_cast %177 : vector<16xf32> to vector<16x1xf32>
      %cst_85 = arith.constant 3.200000e+01 : f32
      %179 = vector.broadcast %cst_85 : f32 to vector<16x1xf32>
      %180 = arith.divf %178, %179 : vector<16x1xf32>
      %cst_86 = arith.constant 9.99999996E-13 : f32
      %181 = vector.broadcast %cst_86 : f32 to vector<16x1xf32>
      %182 = arith.addf %180, %181 : vector<16x1xf32>
      %183 = math.rsqrt %182 : vector<16x1xf32>
      %184 = vector.broadcast %183 : vector<16x1xf32> to vector<16x32xf32>
      %185 = arith.mulf %175, %184 : vector<16x32xf32>
      %186 = vector.broadcast %168 : vector<1x32xf32> to vector<16x32xf32>
      %187 = arith.mulf %185, %186 : vector<16x32xf32>
      %188 = vector.broadcast %169 : vector<1x32xf32> to vector<16x32xf32>
      %189 = arith.addf %187, %188 : vector<16x32xf32>
      %c0_87 = arith.constant 0 : index
      %c0_88 = arith.constant 0 : index
      %190 = vector.load %arg20[%c0_87, %c0_88] : memref<16x32xf32, #tpu.memory_space<vmem>>, vector<16x32xf32>
      tpu.vector_store %arg20[%c0_87, %c0_88], %189 {strides = array<i32>} : memref<16x32xf32, #tpu.memory_space<vmem>>, vector<16x32xf32>,
    } else {
    }
    %c0 = arith.constant 0 : index
    %c0_1 = arith.constant 0 : index
    %3 = vector.load %arg20[%c0, %c0_1] : memref<16x32xf32, #tpu.memory_space<vmem>>, vector<16x32xf32>
    %4 = arith.truncf %3 : vector<16x32xf32> to vector<16x32xbf16>
    %c0_2 = arith.constant 0 : index
    %c0_3 = arith.constant 0 : index
    %c0_4 = arith.constant 0 : index
    %5 = vector.load %arg5[%c0_2, %c0_3, %c0_4] : memref<1x32x96xbf16, #tpu.memory_space<vmem>>, vector<1x32x96xbf16>
    %6 = vector.shape_cast %5 : vector<1x32x96xbf16> to vector<32x96xbf16>
    %cst = arith.constant dense<0.000000e+00> : vector<16x96xf32>
    %7 = tpu.matmul %4, %6, %cst {dimension_numbers = #tpu.dot_dimension_numbers<[1], [0], [0], [1], [0, 0, 1, 1], [], []>} : vector<16x32xbf16>, vector<32x96xbf16>, vector<16x96xf32> -> vector<16x96xf32>
    %c0_5 = arith.constant 0 : index
    %c0_6 = arith.constant 0 : index
    %c0_7 = arith.constant 0 : index
    %8 = vector.load %arg6[%c0_5, %c0_6, %c0_7] : memref<1x1x96xf32, #tpu.memory_space<vmem>>, vector<1x1x96xf32>
    %9 = vector.shape_cast %8 : vector<1x1x96xf32> to vector<1x96xf32>
    %10 = vector.broadcast %9 : vector<1x96xf32> to vector<16x96xf32>
    %11 = arith.addf %7, %10 : vector<16x96xf32>
    %c0_8 = arith.constant 0 : index
    %c0_9 = arith.constant 0 : index
    %12 = vector.load %arg2[%c0_8, %c0_9] : memref<2x8xf32, #tpu.memory_space<vmem>>, vector<2x8xf32>
    %cst_10 = arith.constant 0.000000e+00 : f32
    %13 = vector.broadcast %cst_10 : f32 to vector<16x32xf32>
    %14 = vector.extract_strided_slice %11 {offsets = [0, 0], sizes = [16, 16], strides = [1, 1]} : vector<16x96xf32> to vector<16x16xf32>
    %15 = vector.shape_cast %14 : vector<16x16xf32> to vector<2x8x16xf32>
    %16 = vector.extract_strided_slice %11 {offsets = [0, 32], sizes = [16, 16], strides = [1, 1]} : vector<16x96xf32> to vector<16x16xf32>
    %17 = vector.shape_cast %16 : vector<16x16xf32> to vector<2x8x16xf32>
    %18 = vector.extract_strided_slice %11 {offsets = [0, 64], sizes = [16, 16], strides = [1, 1]} : vector<16x96xf32> to vector<16x16xf32>
    %19 = vector.shape_cast %18 : vector<16x16xf32> to vector<2x8x16xf32>
    %20 = arith.truncf %15 : vector<2x8x16xf32> to vector<2x8x16xbf16>
    %21 = arith.truncf %17 : vector<2x8x16xf32> to vector<2x8x16xbf16>
    "tpu.trace_start"() <{level = 10 : i32, message = "bqd,bkd->bqk"}> : () -> ()
    %cst_11 = arith.constant dense<0.000000e+00> : vector<2x8x8xf32>
    %22 = tpu.matmul %20, %21, %cst_11 {dimension_numbers = #tpu.dot_dimension_numbers<[2], [2], [1], [1], [0, 0, 0, 1, 1, 1], [0], [0]>} : vector<2x8x16xbf16>, vector<2x8x16xbf16>, vector<2x8x8xf32> -> vector<2x8x8xf32>
    "tpu.trace_stop"() : () -> ()
    %cst_12 = arith.constant 2.500000e-01 : f32
    %23 = vector.broadcast %cst_12 : f32 to vector<2x8x8xf32>
    %24 = arith.mulf %22, %23 : vector<2x8x8xf32>
    %25 = vector.shape_cast %12 : vector<2x8xf32> to vector<2x1x8xf32>
    %26 = vector.broadcast %25 : vector<2x1x8xf32> to vector<2x8x8xf32>
    %27 = arith.addf %24, %26 : vector<2x8x8xf32>
    %cst_13 = arith.constant dense<0xFF800000> : vector<2x8xf32>
    %28 = vector.multi_reduction <maximumf>, %27, %cst_13 [2] : vector<2x8x8xf32> to vector<2x8xf32>
    %29 = vector.shape_cast %28 : vector<2x8xf32> to vector<2x8x1xf32>
    %30 = vector.broadcast %29 : vector<2x8x1xf32> to vector<2x8x8xf32>
    %31 = arith.subf %27, %30 : vector<2x8x8xf32>
    %32 = math.exp %31 : vector<2x8x8xf32>
    %cst_14 = arith.constant dense<0.000000e+00> : vector<2x8xf32>
    %33 = vector.multi_reduction <add>, %32, %cst_14 [2] : vector<2x8x8xf32> to vector<2x8xf32>
    %34 = vector.shape_cast %33 : vector<2x8xf32> to vector<2x8x1xf32>
    %35 = tpu.reciprocal %34 {approx = true} : vector<2x8x1xf32> -> vector<2x8x1xf32>
    %36 = vector.broadcast %35 : vector<2x8x1xf32> to vector<2x8x8xf32>
    %37 = arith.mulf %32, %36 : vector<2x8x8xf32>
    %38 = arith.truncf %37 : vector<2x8x8xf32> to vector<2x8x8xbf16>
    %39 = arith.truncf %19 : vector<2x8x16xf32> to vector<2x8x16xbf16>
    "tpu.trace_start"() <{level = 10 : i32, message = "bqk,bkd->bqd"}> : () -> ()
    %cst_15 = arith.constant dense<0.000000e+00> : vector<2x8x16xf32>
    %40 = tpu.matmul %38, %39, %cst_15 {dimension_numbers = #tpu.dot_dimension_numbers<[2], [1], [1], [2], [0, 0, 0, 1, 1, 2], [0], [0]>} : vector<2x8x8xbf16>, vector<2x8x16xbf16>, vector<2x8x16xf32> -> vector<2x8x16xf32>
    "tpu.trace_stop"() : () -> ()
    %41 = vector.shape_cast %40 : vector<2x8x16xf32> to vector<16x16xf32>
    %42 = arith.truncf %41 : vector<16x16xf32> to vector<16x16xbf16>
    %c0_16 = arith.constant 0 : index
    %c0_17 = arith.constant 0 : index
    %c0_18 = arith.constant 0 : index
    %c0_19 = arith.constant 0 : index
    %43 = vector.load %arg7[%c0_16, %c0_17, %c0_18, %c0_19] : memref<1x2x16x32xbf16, #tpu.memory_space<vmem>>, vector<1x1x16x32xbf16>
    %44 = vector.shape_cast %43 : vector<1x1x16x32xbf16> to vector<16x32xbf16>
    %cst_20 = arith.constant dense<0.000000e+00> : vector<16x32xf32>
    %45 = tpu.matmul %42, %44, %cst_20 {dimension_numbers = #tpu.dot_dimension_numbers<[1], [0], [0], [1], [0, 0, 1, 1], [], []>} : vector<16x16xbf16>, vector<16x32xbf16>, vector<16x32xf32> -> vector<16x32xf32>
    %46 = arith.addf %13, %45 : vector<16x32xf32>
    %47 = vector.extract_strided_slice %11 {offsets = [0, 16], sizes = [16, 16], strides = [1, 1]} : vector<16x96xf32> to vector<16x16xf32>
    %48 = vector.shape_cast %47 : vector<16x16xf32> to vector<2x8x16xf32>
    %49 = vector.extract_strided_slice %11 {offsets = [0, 48], sizes = [16, 16], strides = [1, 1]} : vector<16x96xf32> to vector<16x16xf32>
    %50 = vector.shape_cast %49 : vector<16x16xf32> to vector<2x8x16xf32>
    %51 = vector.extract_strided_slice %11 {offsets = [0, 80], sizes = [16, 16], strides = [1, 1]} : vector<16x96xf32> to vector<16x16xf32>
    %52 = vector.shape_cast %51 : vector<16x16xf32> to vector<2x8x16xf32>
    %53 = arith.truncf %48 : vector<2x8x16xf32> to vector<2x8x16xbf16>
    %54 = arith.truncf %50 : vector<2x8x16xf32> to vector<2x8x16xbf16>
    "tpu.trace_start"() <{level = 10 : i32, message = "bqd,bkd->bqk"}> : () -> ()
    %cst_21 = arith.constant dense<0.000000e+00> : vector<2x8x8xf32>
    %55 = tpu.matmul %53, %54, %cst_21 {dimension_numbers = #tpu.dot_dimension_numbers<[2], [2], [1], [1], [0, 0, 0, 1, 1, 1], [0], [0]>} : vector<2x8x16xbf16>, vector<2x8x16xbf16>, vector<2x8x8xf32> -> vector<2x8x8xf32>
    "tpu.trace_stop"() : () -> ()
    %cst_22 = arith.constant 2.500000e-01 : f32
    %56 = vector.broadcast %cst_22 : f32 to vector<2x8x8xf32>
    %57 = arith.mulf %55, %56 : vector<2x8x8xf32>
    %58 = vector.shape_cast %12 : vector<2x8xf32> to vector<2x1x8xf32>
    %59 = vector.broadcast %58 : vector<2x1x8xf32> to vector<2x8x8xf32>
    %60 = arith.addf %57, %59 : vector<2x8x8xf32>
    %cst_23 = arith.constant dense<0xFF800000> : vector<2x8xf32>
    %61 = vector.multi_reduction <maximumf>, %60, %cst_23 [2] : vector<2x8x8xf32> to vector<2x8xf32>
    %62 = vector.shape_cast %61 : vector<2x8xf32> to vector<2x8x1xf32>
    %63 = vector.broadcast %62 : vector<2x8x1xf32> to vector<2x8x8xf32>
    %64 = arith.subf %60, %63 : vector<2x8x8xf32>
    %65 = math.exp %64 : vector<2x8x8xf32>
    %cst_24 = arith.constant dense<0.000000e+00> : vector<2x8xf32>
    %66 = vector.multi_reduction <add>, %65, %cst_24 [2] : vector<2x8x8xf32> to vector<2x8xf32>
    %67 = vector.shape_cast %66 : vector<2x8xf32> to vector<2x8x1xf32>
    %68 = tpu.reciprocal %67 {approx = true} : vector<2x8x1xf32> -> vector<2x8x1xf32>
    %69 = vector.broadcast %68 : vector<2x8x1xf32> to vector<2x8x8xf32>
    %70 = arith.mulf %65, %69 : vector<2x8x8xf32>
    %71 = arith.truncf %70 : vector<2x8x8xf32> to vector<2x8x8xbf16>
    %72 = arith.truncf %52 : vector<2x8x16xf32> to vector<2x8x16xbf16>
    "tpu.trace_start"() <{level = 10 : i32, message = "bqk,bkd->bqd"}> : () -> ()
    %cst_25 = arith.constant dense<0.000000e+00> : vector<2x8x16xf32>
    %73 = tpu.matmul %71, %72, %cst_25 {dimension_numbers = #tpu.dot_dimension_numbers<[2], [1], [1], [2], [0, 0, 0, 1, 1, 2], [0], [0]>} : vector<2x8x8xbf16>, vector<2x8x16xbf16>, vector<2x8x16xf32> -> vector<2x8x16xf32>
    "tpu.trace_stop"() : () -> ()
    %74 = vector.shape_cast %73 : vector<2x8x16xf32> to vector<16x16xf32>
    %75 = arith.truncf %74 : vector<16x16xf32> to vector<16x16xbf16>
    %c0_26 = arith.constant 0 : index
    %c1 = arith.constant 1 : index
    %c0_27 = arith.constant 0 : index
    %c0_28 = arith.constant 0 : index
    %76 = vector.load %arg7[%c0_26, %c1, %c0_27, %c0_28] : memref<1x2x16x32xbf16, #tpu.memory_space<vmem>>, vector<1x1x16x32xbf16>
    %77 = vector.shape_cast %76 : vector<1x1x16x32xbf16> to vector<16x32xbf16>
    %cst_29 = arith.constant dense<0.000000e+00> : vector<16x32xf32>
    %78 = tpu.matmul %75, %77, %cst_29 {dimension_numbers = #tpu.dot_dimension_numbers<[1], [0], [0], [1], [0, 0, 1, 1], [], []>} : vector<16x16xbf16>, vector<16x32xbf16>, vector<16x32xf32> -> vector<16x32xf32>
    %79 = arith.addf %46, %78 : vector<16x32xf32>
    %c0_30 = arith.constant 0 : index
    %c0_31 = arith.constant 0 : index
    %c0_32 = arith.constant 0 : index
    %80 = vector.load %arg8[%c0_30, %c0_31, %c0_32] : memref<1x1x32xf32, #tpu.memory_space<vmem>>, vector<1x1x32xf32>
    %81 = vector.shape_cast %80 : vector<1x1x32xf32> to vector<1x32xf32>
    %82 = vector.broadcast %81 : vector<1x32xf32> to vector<16x32xf32>
    %83 = arith.addf %79, %82 : vector<16x32xf32>
    %84 = arith.addf %83, %3 : vector<16x32xf32>
    %c0_33 = arith.constant 0 : index
    %c0_34 = arith.constant 0 : index
    %c0_35 = arith.constant 0 : index
    %85 = vector.load %arg9[%c0_33, %c0_34, %c0_35] : memref<1x1x32xf32, #tpu.memory_space<vmem>>, vector<1x1x32xf32>
    %86 = vector.shape_cast %85 : vector<1x1x32xf32> to vector<1x32xf32>
    %c0_36 = arith.constant 0 : index
    %c0_37 = arith.constant 0 : index
    %c0_38 = arith.constant 0 : index
    %87 = vector.load %arg10[%c0_36, %c0_37, %c0_38] : memref<1x1x32xf32, #tpu.memory_space<vmem>>, vector<1x1x32xf32>
    %88 = vector.shape_cast %87 : vector<1x1x32xf32> to vector<1x32xf32>
    %cst_39 = arith.constant dense<0.000000e+00> : vector<16xf32>
    %89 = vector.multi_reduction <add>, %84, %cst_39 [1] : vector<16x32xf32> to vector<16xf32>
    %90 = vector.shape_cast %89 : vector<16xf32> to vector<16x1xf32>
    %cst_40 = arith.constant 3.200000e+01 : f32
    %91 = vector.broadcast %cst_40 : f32 to vector<16x1xf32>
    %92 = arith.divf %90, %91 : vector<16x1xf32>
    %93 = vector.broadcast %92 : vector<16x1xf32> to vector<16x32xf32>
    %94 = arith.subf %84, %93 : vector<16x32xf32>
    %95 = arith.mulf %94, %94 : vector<16x32xf32>
    %cst_41 = arith.constant dense<0.000000e+00> : vector<16xf32>
    %96 = vector.multi_reduction <add>, %95, %cst_41 [1] : vector<16x32xf32> to vector<16xf32>
    %97 = vector.shape_cast %96 : vector<16xf32> to vector<16x1xf32>
    %cst_42 = arith.constant 3.200000e+01 : f32
    %98 = vector.broadcast %cst_42 : f32 to vector<16x1xf32>
    %99 = arith.divf %97, %98 : vector<16x1xf32>
    %cst_43 = arith.constant 9.99999996E-13 : f32
    %100 = vector.broadcast %cst_43 : f32 to vector<16x1xf32>
    %101 = arith.addf %99, %100 : vector<16x1xf32>
    %102 = math.rsqrt %101 : vector<16x1xf32>
    %103 = vector.broadcast %102 : vector<16x1xf32> to vector<16x32xf32>
    %104 = arith.mulf %94, %103 : vector<16x32xf32>
    %105 = vector.broadcast %86 : vector<1x32xf32> to vector<16x32xf32>
    %106 = arith.mulf %104, %105 : vector<16x32xf32>
    %107 = vector.broadcast %88 : vector<1x32xf32> to vector<16x32xf32>
    %108 = arith.addf %106, %107 : vector<16x32xf32>
    %109 = arith.truncf %108 : vector<16x32xf32> to vector<16x32xbf16>
    %c0_44 = arith.constant 0 : index
    %c0_45 = arith.constant 0 : index
    %c0_46 = arith.constant 0 : index
    %110 = vector.load %arg11[%c0_44, %c0_45, %c0_46] : memref<1x32x64xbf16, #tpu.memory_space<vmem>>, vector<1x32x64xbf16>
    %111 = vector.shape_cast %110 : vector<1x32x64xbf16> to vector<32x64xbf16>
    %cst_47 = arith.constant dense<0.000000e+00> : vector<16x64xf32>
    %112 = tpu.matmul %109, %111, %cst_47 {dimension_numbers = #tpu.dot_dimension_numbers<[1], [0], [0], [1], [0, 0, 1, 1], [], []>} : vector<16x32xbf16>, vector<32x64xbf16>, vector<16x64xf32> -> vector<16x64xf32>
    %c0_48 = arith.constant 0 : index
    %c0_49 = arith.constant 0 : index
    %c0_50 = arith.constant 0 : index
    %113 = vector.load %arg12[%c0_48, %c0_49, %c0_50] : memref<1x1x64xf32, #tpu.memory_space<vmem>>, vector<1x1x64xf32>
    %114 = vector.shape_cast %113 : vector<1x1x64xf32> to vector<1x64xf32>
    %115 = vector.broadcast %114 : vector<1x64xf32> to vector<16x64xf32>
    %116 = arith.addf %112, %115 : vector<16x64xf32>
    %cst_51 = arith.constant 5.000000e-01 : f32
    %117 = vector.broadcast %cst_51 : f32 to vector<16x64xf32>
    %118 = arith.mulf %117, %116 : vector<16x64xf32>
    %cst_52 = arith.constant 4.471500e-02 : f32
    %119 = vector.broadcast %cst_52 : f32 to vector<16x64xf32>
    %120 = arith.mulf %119, %116 : vector<16x64xf32>
    %121 = arith.mulf %120, %116 : vector<16x64xf32>
    %122 = arith.mulf %121, %116 : vector<16x64xf32>
    %123 = arith.addf %116, %122 : vector<16x64xf32>
    %cst_53 = arith.constant 0.797884583 : f32
    %124 = vector.broadcast %cst_53 : f32 to vector<16x64xf32>
    %125 = arith.mulf %124, %123 : vector<16x64xf32>
    %126 = math.tanh %125 : vector<16x64xf32>
    %cst_54 = arith.constant 1.000000e+00 : f32
    %127 = vector.broadcast %cst_54 : f32 to vector<16x64xf32>
    %128 = arith.addf %127, %126 : vector<16x64xf32>
    %129 = arith.mulf %118, %128 : vector<16x64xf32>
    %130 = arith.truncf %129 : vector<16x64xf32> to vector<16x64xbf16>
    %c0_55 = arith.constant 0 : index
    %c0_56 = arith.constant 0 : index
    %c0_57 = arith.constant 0 : index
    %131 = vector.load %arg13[%c0_55, %c0_56, %c0_57] : memref<1x64x32xbf16, #tpu.memory_space<vmem>>, vector<1x64x32xbf16>
    %132 = vector.shape_cast %131 : vector<1x64x32xbf16> to vector<64x32xbf16>
    %cst_58 = arith.constant dense<0.000000e+00> : vector<16x32xf32>
    %133 = tpu.matmul %130, %132, %cst_58 {dimension_numbers = #tpu.dot_dimension_numbers<[1], [0], [0], [1], [0, 0, 1, 1], [], []>} : vector<16x64xbf16>, vector<64x32xbf16>, vector<16x32xf32> -> vector<16x32xf32>
    %c0_59 = arith.constant 0 : index
    %c0_60 = arith.constant 0 : index
    %c0_61 = arith.constant 0 : index
    %134 = vector.load %arg14[%c0_59, %c0_60, %c0_61] : memref<1x1x32xf32, #tpu.memory_space<vmem>>, vector<1x1x32xf32>
    %135 = vector.shape_cast %134 : vector<1x1x32xf32> to vector<1x32xf32>
    %136 = vector.broadcast %135 : vector<1x32xf32> to vector<16x32xf32>
    %137 = arith.addf %133, %136 : vector<16x32xf32>
    %138 = arith.addf %137, %108 : vector<16x32xf32>
    %c0_62 = arith.constant 0 : index
    %c0_63 = arith.constant 0 : index
    %c0_64 = arith.constant 0 : index
    %139 = vector.load %arg15[%c0_62, %c0_63, %c0_64] : memref<1x1x32xf32, #tpu.memory_space<vmem>>, vector<1x1x32xf32>
    %140 = vector.shape_cast %139 : vector<1x1x32xf32> to vector<1x32xf32>
    %c0_65 = arith.constant 0 : index
    %c0_66 = arith.constant 0 : index
    %c0_67 = arith.constant 0 : index
    %141 = vector.load %arg16[%c0_65, %c0_66, %c0_67] : memref<1x1x32xf32, #tpu.memory_space<vmem>>, vector<1x1x32xf32>
    %142 = vector.shape_cast %141 : vector<1x1x32xf32> to vector<1x32xf32>
    %cst_68 = arith.constant dense<0.000000e+00> : vector<16xf32>
    %143 = vector.multi_reduction <add>, %138, %cst_68 [1] : vector<16x32xf32> to vector<16xf32>
    %144 = vector.shape_cast %143 : vector<16xf32> to vector<16x1xf32>
    %cst_69 = arith.constant 3.200000e+01 : f32
    %145 = vector.broadcast %cst_69 : f32 to vector<16x1xf32>
    %146 = arith.divf %144, %145 : vector<16x1xf32>
    %147 = vector.broadcast %146 : vector<16x1xf32> to vector<16x32xf32>
    %148 = arith.subf %138, %147 : vector<16x32xf32>
    %149 = arith.mulf %148, %148 : vector<16x32xf32>
    %cst_70 = arith.constant dense<0.000000e+00> : vector<16xf32>
    %150 = vector.multi_reduction <add>, %149, %cst_70 [1] : vector<16x32xf32> to vector<16xf32>
    %151 = vector.shape_cast %150 : vector<16xf32> to vector<16x1xf32>
    %cst_71 = arith.constant 3.200000e+01 : f32
    %152 = vector.broadcast %cst_71 : f32 to vector<16x1xf32>
    %153 = arith.divf %151, %152 : vector<16x1xf32>
    %cst_72 = arith.constant 9.99999996E-13 : f32
    %154 = vector.broadcast %cst_72 : f32 to vector<16x1xf32>
    %155 = arith.addf %153, %154 : vector<16x1xf32>
    %156 = math.rsqrt %155 : vector<16x1xf32>
    %157 = vector.broadcast %156 : vector<16x1xf32> to vector<16x32xf32>
    %158 = arith.mulf %148, %157 : vector<16x32xf32>
    %159 = vector.broadcast %140 : vector<1x32xf32> to vector<16x32xf32>
    %160 = arith.mulf %158, %159 : vector<16x32xf32>
    %161 = vector.broadcast %142 : vector<1x32xf32> to vector<16x32xf32>
    %162 = arith.addf %160, %161 : vector<16x32xf32>
    %c0_73 = arith.constant 0 : index
    %c0_74 = arith.constant 0 : index
    %163 = vector.load %arg20[%c0_73, %c0_74] : memref<16x32xf32, #tpu.memory_space<vmem>>, vector<16x32xf32>
    tpu.vector_store %arg20[%c0_73, %c0_74], %162 {strides = array<i32>} : memref<16x32xf32, #tpu.memory_space<vmem>>, vector<16x32xf32>,
    %c1_i32 = arith.constant 1 : i32
    %164 = arith.cmpi eq, %arg0, %c1_i32 : i32
    %165 = arith.extui %164 : i1 to i32
    %c0_i32_75 = arith.constant 0 : i32
    %166 = arith.cmpi ne, %165, %c0_i32_75 : i32
    scf.if %166 {
      %167 = arith.truncf %162 : vector<16x32xf32> to vector<16x32xbf16>
      %c0_76 = arith.constant 0 : index
      %c0_77 = arith.constant 0 : index
      %168 = vector.load %arg17[%c0_76, %c0_77] : memref<32x128xbf16, #tpu.memory_space<vmem>>, vector<32x128xbf16>
      %cst_78 = arith.constant dense<0.000000e+00> : vector<16x128xf32>
      %169 = tpu.matmul %167, %168, %cst_78 {dimension_numbers = #tpu.dot_dimension_numbers<[1], [0], [0], [1], [0, 0, 1, 1], [], []>} : vector<16x32xbf16>, vector<32x128xbf16>, vector<16x128xf32> -> vector<16x128xf32>
      %c0_79 = arith.constant 0 : index
      %c0_80 = arith.constant 0 : index
      %170 = vector.load %arg18[%c0_79, %c0_80] : memref<1x128xf32, #tpu.memory_space<vmem>>, vector<1x128xf32>
      %171 = vector.broadcast %170 : vector<1x128xf32> to vector<16x128xf32>
      %172 = arith.addf %169, %171 : vector<16x128xf32>
      %c0_81 = arith.constant 0 : index
      %c0_82 = arith.constant 0 : index
      %173 = vector.load %arg19[%c0_81, %c0_82] : memref<16x128xf32, #tpu.memory_space<vmem>>, vector<16x128xf32>
      tpu.vector_store %arg19[%c0_81, %c0_82], %172 {strides = array<i32>} : memref<16x128xf32, #tpu.memory_space<vmem>>, vector<16x128xf32>,
    } else {
    }
    return
  }
  func.func @transform_0(%arg0: i32) -> (i32, i32) {
    %c0_i32 = arith.constant 0 : i32
    %c0_i32_0 = arith.constant 0 : i32
    %c0_i32_1 = arith.constant 0 : i32
    return %c0_i32, %c0_i32_0 : i32, i32
  }
  func.func @transform_1(%arg0: i32) -> (i32, i32) {
    %c0_i32 = arith.constant 0 : i32
    %c0_i32_0 = arith.constant 0 : i32
    %c0_i32_1 = arith.constant 0 : i32
    return %c0_i32, %c0_i32_0 : i32, i32
  }
  func.func @transform_2(%arg0: i32) -> (i32, i32) {
    %c0_i32 = arith.constant 0 : i32
    %c0_i32_0 = arith.constant 0 : i32
    %c0_i32_1 = arith.constant 0 : i32
    return %c0_i32, %c0_i32_0 : i32, i32
  }
  func.func @transform_3(%arg0: i32) -> (i32, i32) {
    %c0_i32 = arith.constant 0 : i32
    %c0_i32_0 = arith.constant 0 : i32
    %c0_i32_1 = arith.constant 0 : i32
    return %c0_i32, %c0_i32_0 : i32, i32
  }
  func.func @transform_4(%arg0: i32) -> (i32, i32, i32) {
    %c0_i32 = arith.constant 0 : i32
    %c0_i32_0 = arith.constant 0 : i32
    %c0_i32_1 = arith.constant 0 : i32
    return %arg0, %c0_i32, %c0_i32_0 : i32, i32, i32
  }
  func.func @transform_5(%arg0: i32) -> (i32, i32, i32) {
    %c0_i32 = arith.constant 0 : i32
    %c0_i32_0 = arith.constant 0 : i32
    %c0_i32_1 = arith.constant 0 : i32
    return %arg0, %c0_i32, %c0_i32_0 : i32, i32, i32
  }
  func.func @transform_6(%arg0: i32) -> (i32, i32, i32, i32) {
    %c0_i32 = arith.constant 0 : i32
    %c0_i32_0 = arith.constant 0 : i32
    %c0_i32_1 = arith.constant 0 : i32
    %c0_i32_2 = arith.constant 0 : i32
    return %arg0, %c0_i32, %c0_i32_0, %c0_i32_1 : i32, i32, i32, i32
  }
  func.func @transform_7(%arg0: i32) -> (i32, i32, i32) {
    %c0_i32 = arith.constant 0 : i32
    %c0_i32_0 = arith.constant 0 : i32
    %c0_i32_1 = arith.constant 0 : i32
    return %arg0, %c0_i32, %c0_i32_0 : i32, i32, i32
  }
  func.func @transform_8(%arg0: i32) -> (i32, i32, i32) {
    %c0_i32 = arith.constant 0 : i32
    %c0_i32_0 = arith.constant 0 : i32
    %c0_i32_1 = arith.constant 0 : i32
    return %arg0, %c0_i32, %c0_i32_0 : i32, i32, i32
  }
  func.func @transform_9(%arg0: i32) -> (i32, i32, i32) {
    %c0_i32 = arith.constant 0 : i32
    %c0_i32_0 = arith.constant 0 : i32
    %c0_i32_1 = arith.constant 0 : i32
    return %arg0, %c0_i32, %c0_i32_0 : i32, i32, i32
  }
  func.func @transform_10(%arg0: i32) -> (i32, i32, i32) {
    %c0_i32 = arith.constant 0 : i32
    %c0_i32_0 = arith.constant 0 : i32
    %c0_i32_1 = arith.constant 0 : i32
    return %arg0, %c0_i32, %c0_i32_0 : i32, i32, i32
  }
  func.func @transform_11(%arg0: i32) -> (i32, i32, i32) {
    %c0_i32 = arith.constant 0 : i32
    %c0_i32_0 = arith.constant 0 : i32
    %c0_i32_1 = arith.constant 0 : i32
    return %arg0, %c0_i32, %c0_i32_0 : i32, i32, i32
  }
  func.func @transform_12(%arg0: i32) -> (i32, i32, i32) {
    %c0_i32 = arith.constant 0 : i32
    %c0_i32_0 = arith.constant 0 : i32
    %c0_i32_1 = arith.constant 0 : i32
    return %arg0, %c0_i32, %c0_i32_0 : i32, i32, i32
  }
  func.func @transform_13(%arg0: i32) -> (i32, i32, i32) {
    %c0_i32 = arith.constant 0 : i32
    %c0_i32_0 = arith.constant 0 : i32
    %c0_i32_1 = arith.constant 0 : i32
    return %arg0, %c0_i32, %c0_i32_0 : i32, i32, i32
  }
  func.func @transform_14(%arg0: i32) -> (i32, i32, i32) {
    %c0_i32 = arith.constant 0 : i32
    %c0_i32_0 = arith.constant 0 : i32
    %c0_i32_1 = arith.constant 0 : i32
    return %arg0, %c0_i32, %c0_i32_0 : i32, i32, i32
  }
  func.func @transform_15(%arg0: i32) -> (i32, i32, i32) {
    %c0_i32 = arith.constant 0 : i32
    %c0_i32_0 = arith.constant 0 : i32
    %c0_i32_1 = arith.constant 0 : i32
    return %arg0, %c0_i32, %c0_i32_0 : i32, i32, i32
  }
  func.func @transform_16(%arg0: i32) -> (i32, i32) {
    %c0_i32 = arith.constant 0 : i32
    %c0_i32_0 = arith.constant 0 : i32
    %c0_i32_1 = arith.constant 0 : i32
    return %c0_i32, %c0_i32_0 : i32, i32
  }
  func.func @transform_17(%arg0: i32) -> (i32, i32) {
    %c0_i32 = arith.constant 0 : i32
    %c0_i32_0 = arith.constant 0 : i32
    %c0_i32_1 = arith.constant 0 : i32
    return %c0_i32, %c0_i32_0 : i32, i32
  }
  func.func @transform_18(%arg0: i32) -> (i32, i32) {
    %c0_i32 = arith.constant 0 : i32
    %c0_i32_0 = arith.constant 0 : i32
    %c0_i32_1 = arith.constant 0 : i32
    return %c0_i32, %c0_i32_0 : i32, i32
  }
}

</mosaic_0001>

<llo_original>
// kernel: bert_pos_tagger_forward.1
$region0: #{bert_pos_tagger_forward.1}
  #allocation0 [shape = 'u32[]', space=smem, size = 0x4, offset = 0x4, fixed_abs, tag = 'smem constant byte address 0x4 - core index']
  #allocation1 [shape = 'u32[144,128]{1,0:T(1,128)}', space=vmem, size = 0x12000, scoped, tag = 'internal scratch']
  #allocation2 [shape = 'f32[16,32]{1,0:T(8,128)}', space=vmem, size = 0x2000, scoped, tag = 'scratch operand']
  %s0 = inlined_call_operand.vmem [shape: f32[16,32], index: 0, kind: input, shape index: {}]
  %s1 = inlined_call_operand.vmem [shape: f32[2,8], index: 1, kind: input, shape index: {}]
  %s2 = inlined_call_operand.vmem [shape: f32[1,32], index: 2, kind: input, shape index: {}]
  %s3 = inlined_call_operand.vmem [shape: f32[1,32], index: 3, kind: input, shape index: {}]
  %s4 = inlined_call_operand.vmem [shape: bf16[2,32,96], index: 4, kind: input, shape index: {}]
  %s5 = inlined_call_operand.vmem [shape: f32[2,1,96], index: 5, kind: input, shape index: {}]
  %s6 = inlined_call_operand.vmem [shape: bf16[2,2,16,32], index: 6, kind: input, shape index: {}]
  %s7 = inlined_call_operand.vmem [shape: f32[2,1,32], index: 7, kind: input, shape index: {}]
  %s8 = inlined_call_operand.vmem [shape: f32[2,1,32], index: 8, kind: input, shape index: {}]
  %s9 = inlined_call_operand.vmem [shape: f32[2,1,32], index: 9, kind: input, shape index: {}]
  %s10 = inlined_call_operand.vmem [shape: bf16[2,32,64], index: 10, kind: input, shape index: {}]
  %s11 = inlined_call_operand.vmem [shape: f32[2,1,64], index: 11, kind: input, shape index: {}]
  %s12 = inlined_call_operand.vmem [shape: bf16[2,64,32], index: 12, kind: input, shape index: {}]
  %s13 = inlined_call_operand.vmem [shape: f32[2,1,32], index: 13, kind: input, shape index: {}]
  %s14 = inlined_call_operand.vmem [shape: f32[2,1,32], index: 14, kind: input, shape index: {}]
  %s15 = inlined_call_operand.vmem [shape: f32[2,1,32], index: 15, kind: input, shape index: {}]
  %s16 = inlined_call_operand.vmem [shape: bf16[32,128], index: 16, kind: input, shape index: {}]
  %s17 = inlined_call_operand.vmem [shape: f32[1,128], index: 17, kind: input, shape index: {}]
  %s18 = inlined_call_operand.vmem [shape: f32[16,128], index: 18, kind: output, shape index: {}]
  %s19 = sld [smem:[#allocation0]]
  $region113: #{bert_pos_tagger_forward.1} parent=0
    _
  %s21 = ssub.s32 1, %s19
  %s22 = scalar_select 0, %s21, %s19
  loop: start=0, step=1, limit=4
  $region2: #{bert_pos_tagger_forward.1} parent=0 // loop_pre_header
    _
  $region3: #{bert_pos_tagger_forward.1} parent=0 // loop_header
    %s24 = sphi 0, %s28
    %p25 = scmp.ge.s32.totalorder %s24, 4
    %s32 = sphi 0, %s32
    %s34 = sphi 0, %s32
    %s35 = sphi 0, %s34
    %s49 = sphi 0, %s35
    %s53 = sphi 0, %s53
    %s55 = sphi 0, %s53
    %s56 = sphi 0, %s55
    %s70 = sphi 0, %s56
    %s74 = sphi 0, %s74
    %s76 = sphi 0, %s74
    %s77 = sphi 0, %s76
    %s91 = sphi 0, %s77
    %s95 = sphi 0, %s95
    %s97 = sphi 0, %s95
    %s98 = sphi 0, %s97
    %s112 = sphi 0, %s98
    %s118 = sphi 0, %s120
    %s121 = sphi 0, %s118
    %s122 = sphi 0, %s121
    %s138 = sphi 0, %s122
    %s144 = sphi 0, %s146
    %s147 = sphi 0, %s144
    %s148 = sphi 0, %s147
    %s164 = sphi 0, %s148
    %s170 = sphi 0, %s172
    %s173 = sphi 0, %s170
    %s174 = sphi 0, %s173
    %s190 = sphi 0, %s174
    %s196 = sphi 0, %s198
    %s199 = sphi 0, %s196
    %s200 = sphi 0, %s199
    %s216 = sphi 0, %s200
    %s222 = sphi 0, %s224
    %s225 = sphi 0, %s222
    %s226 = sphi 0, %s225
    %s242 = sphi 0, %s226
    %s248 = sphi 0, %s250
    %s251 = sphi 0, %s248
    %s252 = sphi 0, %s251
    %s268 = sphi 0, %s252
    %s274 = sphi 0, %s276
    %s277 = sphi 0, %s274
    %s278 = sphi 0, %s277
    %s294 = sphi 0, %s278
    %s300 = sphi 0, %s302
    %s303 = sphi 0, %s300
    %s304 = sphi 0, %s303
    %s320 = sphi 0, %s304
    %s326 = sphi 0, %s328
    %s329 = sphi 0, %s326
    %s330 = sphi 0, %s329
    %s346 = sphi 0, %s330
    %s352 = sphi 0, %s354
    %s355 = sphi 0, %s352
    %s356 = sphi 0, %s355
    %s372 = sphi 0, %s356
    %s378 = sphi 0, %s380
    %s381 = sphi 0, %s378
    %s382 = sphi 0, %s381
    %s398 = sphi 0, %s382
    %s404 = sphi 0, %s406
    %s407 = sphi 0, %s404
    %s408 = sphi 0, %s407
    %s424 = sphi 0, %s408
    %s428 = sphi 0, %s428
    %s430 = sphi 0, %s428
    %s431 = sphi 0, %s430
    %s445 = sphi 0, %s431
    %s449 = sphi 0, %s449
    %s451 = sphi 0, %s449
    %s452 = sphi 0, %s451
    %s466 = sphi 0, %s452
    %s470 = sphi 0, %s470
    %s472 = sphi 0, %s470
    %s473 = sphi 0, %s472
    %s487 = sphi 0, %s473
  $region4: #{bert_pos_tagger_forward.1} parent=0 // loop_header_branch
    %27 = sbr.rel (%p25) target = $region8
  $region5: #{bert_pos_tagger_forward.1} parent=0 // loop_body
    %s29 = ssub.s32 %s24, 1
    %s30 = ssub.s32 %s24, 2
    %s31 = sadd.s32 %s24, 1
    %s33 = sadd.s32 %s32, 1
    %p36 = scmp.eq.s32.totalorder %s24, 1
    %p37 = scmp.ne.s32.totalorder %s32, %s34
    %p38 = scmp.eq.s32.totalorder %s24, 0
    %p39 = por %p37, %p38
    %p40 = scmp.ne.s32.totalorder %s32, %s34
    %p41 = scmp.eq.s32.totalorder %s29, 1
    %p42 = por %p40, %p41
    %p43 = scmp.ne.s32.totalorder %s34, %s35
    %p44 = scmp.eq.s32.totalorder %s29, 0
    %p45 = por %p43, %p44
    %p46 = scmp.ne.s32.totalorder %s34, %s35
    %p47 = scmp.eq.s32.totalorder %s30, 1
    %p48 = por %p46, %p47
    %p50 = scmp.ne.s32.totalorder %s35, %s49
    %p51 = scmp.eq.s32.totalorder %s30, 0
    %p52 = por %p50, %p51
    %s54 = sadd.s32 %s53, 1
    %p57 = scmp.eq.s32.totalorder %s24, 1
    %p58 = scmp.ne.s32.totalorder %s53, %s55
    %p59 = scmp.eq.s32.totalorder %s24, 0
    %p60 = por %p58, %p59
    %p61 = scmp.ne.s32.totalorder %s53, %s55
    %p62 = scmp.eq.s32.totalorder %s29, 1
    %p63 = por %p61, %p62
    %p64 = scmp.ne.s32.totalorder %s55, %s56
    %p65 = scmp.eq.s32.totalorder %s29, 0
    %p66 = por %p64, %p65
    %p67 = scmp.ne.s32.totalorder %s55, %s56
    %p68 = scmp.eq.s32.totalorder %s30, 1
    %p69 = por %p67, %p68
    %p71 = scmp.ne.s32.totalorder %s56, %s70
    %p72 = scmp.eq.s32.totalorder %s30, 0
    %p73 = por %p71, %p72
    %s75 = sadd.s32 %s74, 1
    %p78 = scmp.eq.s32.totalorder %s24, 1
    %p79 = scmp.ne.s32.totalorder %s74, %s76
    %p80 = scmp.eq.s32.totalorder %s24, 0
    %p81 = por %p79, %p80
    %p82 = scmp.ne.s32.totalorder %s74, %s76
    %p83 = scmp.eq.s32.totalorder %s29, 1
    %p84 = por %p82, %p83
    %p85 = scmp.ne.s32.totalorder %s76, %s77
    %p86 = scmp.eq.s32.totalorder %s29, 0
    %p87 = por %p85, %p86
    %p88 = scmp.ne.s32.totalorder %s76, %s77
    %p89 = scmp.eq.s32.totalorder %s30, 1
    %p90 = por %p88, %p89
    %p92 = scmp.ne.s32.totalorder %s77, %s91
    %p93 = scmp.eq.s32.totalorder %s30, 0
    %p94 = por %p92, %p93
    %s96 = sadd.s32 %s95, 1
    %p99 = scmp.eq.s32.totalorder %s24, 1
    %p100 = scmp.ne.s32.totalorder %s95, %s97
    %p101 = scmp.eq.s32.totalorder %s24, 0
    %p102 = por %p100, %p101
    %p103 = scmp.ne.s32.totalorder %s95, %s97
    %p104 = scmp.eq.s32.totalorder %s29, 1
    %p105 = por %p103, %p104
    %p106 = scmp.ne.s32.totalorder %s97, %s98
    %p107 = scmp.eq.s32.totalorder %s29, 0
    %p108 = por %p106, %p107
    %p109 = scmp.ne.s32.totalorder %s97, %s98
    %p110 = scmp.eq.s32.totalorder %s30, 1
    %p111 = por %p109, %p110
    %p113 = scmp.ne.s32.totalorder %s98, %s112
    %p114 = scmp.eq.s32.totalorder %s30, 0
    %p115 = por %p113, %p114
    %s116 = ssub.s32 %s24, %s31
    %p117 = scmp.eq.s32.totalorder %s116, 0
    %s119 = sadd.s32 %s118, 1
    %s120 = scalar_select %p117, %s118, %s119
    %p123 = pneg %p117
    %p124 = scmp.eq.s32.totalorder %s24, 1
    %p125 = por %p123, %p124
    %p126 = scmp.ne.s32.totalorder %s118, %s121
    %p127 = scmp.eq.s32.totalorder %s24, 0
    %p128 = por %p126, %p127
    %p129 = scmp.ne.s32.totalorder %s118, %s121
    %p130 = scmp.eq.s32.totalorder %s29, 1
    %p131 = por %p129, %p130
    %p132 = scmp.ne.s32.totalorder %s121, %s122
    %p133 = scmp.eq.s32.totalorder %s29, 0
    %p134 = por %p132, %p133
    %p135 = scmp.ne.s32.totalorder %s121, %s122
    %p136 = scmp.eq.s32.totalorder %s30, 1
    %p137 = por %p135, %p136
    %p139 = scmp.ne.s32.totalorder %s122, %s138
    %p140 = scmp.eq.s32.totalorder %s30, 0
    %p141 = por %p139, %p140
    %s142 = ssub.s32 %s24, %s31
    %p143 = scmp.eq.s32.totalorder %s142, 0
    %s145 = sadd.s32 %s144, 1
    %s146 = scalar_select %p143, %s144, %s145
    %p149 = pneg %p143
    %p150 = scmp.eq.s32.totalorder %s24, 1
    %p151 = por %p149, %p150
    %p152 = scmp.ne.s32.totalorder %s144, %s147
    %p153 = scmp.eq.s32.totalorder %s24, 0
    %p154 = por %p152, %p153
    %p155 = scmp.ne.s32.totalorder %s144, %s147
    %p156 = scmp.eq.s32.totalorder %s29, 1
    %p157 = por %p155, %p156
    %p158 = scmp.ne.s32.totalorder %s147, %s148
    %p159 = scmp.eq.s32.totalorder %s29, 0
    %p160 = por %p158, %p159
    %p161 = scmp.ne.s32.totalorder %s147, %s148
    %p162 = scmp.eq.s32.totalorder %s30, 1
    %p163 = por %p161, %p162
    %p165 = scmp.ne.s32.totalorder %s148, %s164
    %p166 = scmp.eq.s32.totalorder %s30, 0
    %p167 = por %p165, %p166
    %s168 = ssub.s32 %s24, %s31
    %p169 = scmp.eq.s32.totalorder %s168, 0
    %s171 = sadd.s32 %s170, 1
    %s172 = scalar_select %p169, %s170, %s171
    %p175 = pneg %p169
    %p176 = scmp.eq.s32.totalorder %s24, 1
    %p177 = por %p175, %p176
    %p178 = scmp.ne.s32.totalorder %s170, %s173
    %p179 = scmp.eq.s32.totalorder %s24, 0
    %p180 = por %p178, %p179
    %p181 = scmp.ne.s32.totalorder %s170, %s173
    %p182 = scmp.eq.s32.totalorder %s29, 1
    %p183 = por %p181, %p182
    %p184 = scmp.ne.s32.totalorder %s173, %s174
    %p185 = scmp.eq.s32.totalorder %s29, 0
    %p186 = por %p184, %p185
    %p187 = scmp.ne.s32.totalorder %s173, %s174
    %p188 = scmp.eq.s32.totalorder %s30, 1
    %p189 = por %p187, %p188
    %p191 = scmp.ne.s32.totalorder %s174, %s190
    %p192 = scmp.eq.s32.totalorder %s30, 0
    %p193 = por %p191, %p192
    %s194 = ssub.s32 %s24, %s31
    %p195 = scmp.eq.s32.totalorder %s194, 0
    %s197 = sadd.s32 %s196, 1
    %s198 = scalar_select %p195, %s196, %s197
    %p201 = pneg %p195
    %p202 = scmp.eq.s32.totalorder %s24, 1
    %p203 = por %p201, %p202
    %p204 = scmp.ne.s32.totalorder %s196, %s199
    %p205 = scmp.eq.s32.totalorder %s24, 0
    %p206 = por %p204, %p205
    %p207 = scmp.ne.s32.totalorder %s196, %s199
    %p208 = scmp.eq.s32.totalorder %s29, 1
    %p209 = por %p207, %p208
    %p210 = scmp.ne.s32.totalorder %s199, %s200
    %p211 = scmp.eq.s32.totalorder %s29, 0
    %p212 = por %p210, %p211
    %p213 = scmp.ne.s32.totalorder %s199, %s200
    %p214 = scmp.eq.s32.totalorder %s30, 1
    %p215 = por %p213, %p214
    %p217 = scmp.ne.s32.totalorder %s200, %s216
    %p218 = scmp.eq.s32.totalorder %s30, 0
    %p219 = por %p217, %p218
    %s220 = ssub.s32 %s24, %s31
    %p221 = scmp.eq.s32.totalorder %s220, 0
    %s223 = sadd.s32 %s222, 1
    %s224 = scalar_select %p221, %s222, %s223
    %p227 = pneg %p221
    %p228 = scmp.eq.s32.totalorder %s24, 1
    %p229 = por %p227, %p228
    %p230 = scmp.ne.s32.totalorder %s222, %s225
    %p231 = scmp.eq.s32.totalorder %s24, 0
    %p232 = por %p230, %p231
    %p233 = scmp.ne.s32.totalorder %s222, %s225
    %p234 = scmp.eq.s32.totalorder %s29, 1
    %p235 = por %p233, %p234
    %p236 = scmp.ne.s32.totalorder %s225, %s226
    %p237 = scmp.eq.s32.totalorder %s29, 0
    %p238 = por %p236, %p237
    %p239 = scmp.ne.s32.totalorder %s225, %s226
    %p240 = scmp.eq.s32.totalorder %s30, 1
    %p241 = por %p239, %p240
    %p243 = scmp.ne.s32.totalorder %s226, %s242
    %p244 = scmp.eq.s32.totalorder %s30, 0
    %p245 = por %p243, %p244
    %s246 = ssub.s32 %s24, %s31
    %p247 = scmp.eq.s32.totalorder %s246, 0
    %s249 = sadd.s32 %s248, 1
    %s250 = scalar_select %p247, %s248, %s249
    %p253 = pneg %p247
    %p254 = scmp.eq.s32.totalorder %s24, 1
    %p255 = por %p253, %p254
    %p256 = scmp.ne.s32.totalorder %s248, %s251
    %p257 = scmp.eq.s32.totalorder %s24, 0
    %p258 = por %p256, %p257
    %p259 = scmp.ne.s32.totalorder %s248, %s251
    %p260 = scmp.eq.s32.totalorder %s29, 1
    %p261 = por %p259, %p260
    %p262 = scmp.ne.s32.totalorder %s251, %s252
    %p263 = scmp.eq.s32.totalorder %s29, 0
    %p264 = por %p262, %p263
    %p265 = scmp.ne.s32.totalorder %s251, %s252
    %p266 = scmp.eq.s32.totalorder %s30, 1
    %p267 = por %p265, %p266
    %p269 = scmp.ne.s32.totalorder %s252, %s268
    %p270 = scmp.eq.s32.totalorder %s30, 0
    %p271 = por %p269, %p270
    %s272 = ssub.s32 %s24, %s31
    %p273 = scmp.eq.s32.totalorder %s272, 0
    %s275 = sadd.s32 %s274, 1
    %s276 = scalar_select %p273, %s274, %s275
    %p279 = pneg %p273
    %p280 = scmp.eq.s32.totalorder %s24, 1
    %p281 = por %p279, %p280
    %p282 = scmp.ne.s32.totalorder %s274, %s277
    %p283 = scmp.eq.s32.totalorder %s24, 0
    %p284 = por %p282, %p283
    %p285 = scmp.ne.s32.totalorder %s274, %s277
    %p286 = scmp.eq.s32.totalorder %s29, 1
    %p287 = por %p285, %p286
    %p288 = scmp.ne.s32.totalorder %s277, %s278
    %p289 = scmp.eq.s32.totalorder %s29, 0
    %p290 = por %p288, %p289
    %p291 = scmp.ne.s32.totalorder %s277, %s278
    %p292 = scmp.eq.s32.totalorder %s30, 1
    %p293 = por %p291, %p292
    %p295 = scmp.ne.s32.totalorder %s278, %s294
    %p296 = scmp.eq.s32.totalorder %s30, 0
    %p297 = por %p295, %p296
    %s298 = ssub.s32 %s24, %s31
    %p299 = scmp.eq.s32.totalorder %s298, 0
    %s301 = sadd.s32 %s300, 1
    %s302 = scalar_select %p299, %s300, %s301
    %p305 = pneg %p299
    %p306 = scmp.eq.s32.totalorder %s24, 1
    %p307 = por %p305, %p306
    %p308 = scmp.ne.s32.totalorder %s300, %s303
    %p309 = scmp.eq.s32.totalorder %s24, 0
    %p310 = por %p308, %p309
    %p311 = scmp.ne.s32.totalorder %s300, %s303
    %p312 = scmp.eq.s32.totalorder %s29, 1
    %p313 = por %p311, %p312
    %p314 = scmp.ne.s32.totalorder %s303, %s304
    %p315 = scmp.eq.s32.totalorder %s29, 0
    %p316 = por %p314, %p315
    %p317 = scmp.ne.s32.totalorder %s303, %s304
    %p318 = scmp.eq.s32.totalorder %s30, 1
    %p319 = por %p317, %p318
    %p321 = scmp.ne.s32.totalorder %s304, %s320
    %p322 = scmp.eq.s32.totalorder %s30, 0
    %p323 = por %p321, %p322
    %s324 = ssub.s32 %s24, %s31
    %p325 = scmp.eq.s32.totalorder %s324, 0
    %s327 = sadd.s32 %s326, 1
    %s328 = scalar_select %p325, %s326, %s327
    %p331 = pneg %p325
    %p332 = scmp.eq.s32.totalorder %s24, 1
    %p333 = por %p331, %p332
    %p334 = scmp.ne.s32.totalorder %s326, %s329
    %p335 = scmp.eq.s32.totalorder %s24, 0
    %p336 = por %p334, %p335
    %p337 = scmp.ne.s32.totalorder %s326, %s329
    %p338 = scmp.eq.s32.totalorder %s29, 1
    %p339 = por %p337, %p338
    %p340 = scmp.ne.s32.totalorder %s329, %s330
    %p341 = scmp.eq.s32.totalorder %s29, 0
    %p342 = por %p340, %p341
    %p343 = scmp.ne.s32.totalorder %s329, %s330
    %p344 = scmp.eq.s32.totalorder %s30, 1
    %p345 = por %p343, %p344
    %p347 = scmp.ne.s32.totalorder %s330, %s346
    %p348 = scmp.eq.s32.totalorder %s30, 0
    %p349 = por %p347, %p348
    %s350 = ssub.s32 %s24, %s31
    %p351 = scmp.eq.s32.totalorder %s350, 0
    %s353 = sadd.s32 %s352, 1
    %s354 = scalar_select %p351, %s352, %s353
    %p357 = pneg %p351
    %p358 = scmp.eq.s32.totalorder %s24, 1
    %p359 = por %p357, %p358
    %p360 = scmp.ne.s32.totalorder %s352, %s355
    %p361 = scmp.eq.s32.totalorder %s24, 0
    %p362 = por %p360, %p361
    %p363 = scmp.ne.s32.totalorder %s352, %s355
    %p364 = scmp.eq.s32.totalorder %s29, 1
    %p365 = por %p363, %p364
    %p366 = scmp.ne.s32.totalorder %s355, %s356
    %p367 = scmp.eq.s32.totalorder %s29, 0
    %p368 = por %p366, %p367
    %p369 = scmp.ne.s32.totalorder %s355, %s356
    %p370 = scmp.eq.s32.totalorder %s30, 1
    %p371 = por %p369, %p370
    %p373 = scmp.ne.s32.totalorder %s356, %s372
    %p374 = scmp.eq.s32.totalorder %s30, 0
    %p375 = por %p373, %p374
    %s376 = ssub.s32 %s24, %s31
    %p377 = scmp.eq.s32.totalorder %s376, 0
    %s379 = sadd.s32 %s378, 1
    %s380 = scalar_select %p377, %s378, %s379
    %p383 = pneg %p377
    %p384 = scmp.eq.s32.totalorder %s24, 1
    %p385 = por %p383, %p384
    %p386 = scmp.ne.s32.totalorder %s378, %s381
    %p387 = scmp.eq.s32.totalorder %s24, 0
    %p388 = por %p386, %p387
    %p389 = scmp.ne.s32.totalorder %s378, %s381
    %p390 = scmp.eq.s32.totalorder %s29, 1
    %p391 = por %p389, %p390
    %p392 = scmp.ne.s32.totalorder %s381, %s382
    %p393 = scmp.eq.s32.totalorder %s29, 0
    %p394 = por %p392, %p393
    %p395 = scmp.ne.s32.totalorder %s381, %s382
    %p396 = scmp.eq.s32.totalorder %s30, 1
    %p397 = por %p395, %p396
    %p399 = scmp.ne.s32.totalorder %s382, %s398
    %p400 = scmp.eq.s32.totalorder %s30, 0
    %p401 = por %p399, %p400
    %s402 = ssub.s32 %s24, %s31
    %p403 = scmp.eq.s32.totalorder %s402, 0
    %s405 = sadd.s32 %s404, 1
    %s406 = scalar_select %p403, %s404, %s405
    %p409 = pneg %p403
    %p410 = scmp.eq.s32.totalorder %s24, 1
    %p411 = por %p409, %p410
    %p412 = scmp.ne.s32.totalorder %s404, %s407
    %p413 = scmp.eq.s32.totalorder %s24, 0
    %p414 = por %p412, %p413
    %p415 = scmp.ne.s32.totalorder %s404, %s407
    %p416 = scmp.eq.s32.totalorder %s29, 1
    %p417 = por %p415, %p416
    %p418 = scmp.ne.s32.totalorder %s407, %s408
    %p419 = scmp.eq.s32.totalorder %s29, 0
    %p420 = por %p418, %p419
    %p421 = scmp.ne.s32.totalorder %s407, %s408
    %p422 = scmp.eq.s32.totalorder %s30, 1
    %p423 = por %p421, %p422
    %p425 = scmp.ne.s32.totalorder %s408, %s424
    %p426 = scmp.eq.s32.totalorder %s30, 0
    %p427 = por %p425, %p426
    %s429 = sadd.s32 %s428, 1
    %p432 = scmp.eq.s32.totalorder %s24, 1
    %p433 = scmp.ne.s32.totalorder %s428, %s430
    %p434 = scmp.eq.s32.totalorder %s24, 0
    %p435 = por %p433, %p434
    %p436 = scmp.ne.s32.totalorder %s428, %s430
    %p437 = scmp.eq.s32.totalorder %s29, 1
    %p438 = por %p436, %p437
    %p439 = scmp.ne.s32.totalorder %s430, %s431
    %p440 = scmp.eq.s32.totalorder %s29, 0
    %p441 = por %p439, %p440
    %p442 = scmp.ne.s32.totalorder %s430, %s431
    %p443 = scmp.eq.s32.totalorder %s30, 1
    %p444 = por %p442, %p443
    %p446 = scmp.ne.s32.totalorder %s431, %s445
    %p447 = scmp.eq.s32.totalorder %s30, 0
    %p448 = por %p446, %p447
    %s450 = sadd.s32 %s449, 1
    %p453 = scmp.eq.s32.totalorder %s24, 1
    %p454 = scmp.ne.s32.totalorder %s449, %s451
    %p455 = scmp.eq.s32.totalorder %s24, 0
    %p456 = por %p454, %p455
    %p457 = scmp.ne.s32.totalorder %s449, %s451
    %p458 = scmp.eq.s32.totalorder %s29, 1
    %p459 = por %p457, %p458
    %p460 = scmp.ne.s32.totalorder %s451, %s452
    %p461 = scmp.eq.s32.totalorder %s29, 0
    %p462 = por %p460, %p461
    %p463 = scmp.ne.s32.totalorder %s451, %s452
    %p464 = scmp.eq.s32.totalorder %s30, 1
    %p465 = por %p463, %p464
    %p467 = scmp.ne.s32.totalorder %s452, %s466
    %p468 = scmp.eq.s32.totalorder %s30, 0
    %p469 = por %p467, %p468
    %s471 = sadd.s32 %s470, 1
    %p474 = scmp.eq.s32.totalorder %s24, 1
    %p475 = scmp.ne.s32.totalorder %s470, %s472
    %p476 = scmp.eq.s32.totalorder %s24, 0
    %p477 = por %p475, %p476
    %p478 = scmp.ne.s32.totalorder %s470, %s472
    %p479 = scmp.eq.s32.totalorder %s29, 1
    %p480 = por %p478, %p479
    %p481 = scmp.ne.s32.totalorder %s472, %s473
    %p482 = scmp.eq.s32.totalorder %s29, 0
    %p483 = por %p481, %p482
    %p484 = scmp.ne.s32.totalorder %s472, %s473
    %p485 = scmp.eq.s32.totalorder %s30, 1
    %p486 = por %p484, %p485
    %p488 = scmp.ne.s32.totalorder %s473, %s487
    %p489 = scmp.eq.s32.totalorder %s30, 0
    %p490 = por %p488, %p489
    %p491 = scmp.le.s32.totalorder 1, %s24
    %p492 = scmp.lt.s32.totalorder %s24, 3
    %p493 = pnand %p491, %p492
    %p494 = pneg %p493
    // Predicated region
    $region9: #{bert_pos_tagger_forward.1} parent=5 // pred_check
      _
    $region10: #{bert_pos_tagger_forward.1} parent=5 // pred_check_branch
      %496 = sbr.rel (%p493) target = $region12
    $region11: #{bert_pos_tagger_forward.1} parent=5 // pred_region
      %s497 = ssub.s32 %s24, 1
      // Predicated region
      $region13: #{bert_pos_tagger_forward.1} parent=11 // pred_check
        %p498 = pneg %p45
      $region14: #{bert_pos_tagger_forward.1} parent=11 // pred_check_branch
        %500 = sbr.rel (%p498) target = $region16
      $region15: #{bert_pos_tagger_forward.1} parent=11 // pred_region
        _
      $region16: #{bert_pos_tagger_forward.1} parent=11 // pred_fallthru
        _
      // Predicated region
      $region17: #{bert_pos_tagger_forward.1} parent=11 // pred_check
        %p501 = pneg %p66
      $region18: #{bert_pos_tagger_forward.1} parent=11 // pred_check_branch
        %503 = sbr.rel (%p501) target = $region20
      $region19: #{bert_pos_tagger_forward.1} parent=11 // pred_region
        _
      $region20: #{bert_pos_tagger_forward.1} parent=11 // pred_fallthru
        _
      // Predicated region
      $region21: #{bert_pos_tagger_forward.1} parent=11 // pred_check
        %p504 = pneg %p87
      $region22: #{bert_pos_tagger_forward.1} parent=11 // pred_check_branch
        %506 = sbr.rel (%p504) target = $region24
      $region23: #{bert_pos_tagger_forward.1} parent=11 // pred_region
        _
      $region24: #{bert_pos_tagger_forward.1} parent=11 // pred_fallthru
        _
      // Predicated region
      $region25: #{bert_pos_tagger_forward.1} parent=11 // pred_check
        %p507 = pneg %p108
      $region26: #{bert_pos_tagger_forward.1} parent=11 // pred_check_branch
        %509 = sbr.rel (%p507) target = $region28
      $region27: #{bert_pos_tagger_forward.1} parent=11 // pred_region
        _
      $region28: #{bert_pos_tagger_forward.1} parent=11 // pred_fallthru
        _
      // Predicated region
      $region29: #{bert_pos_tagger_forward.1} parent=11 // pred_check
        %p510 = pneg %p441
      $region30: #{bert_pos_tagger_forward.1} parent=11 // pred_check_branch
        %512 = sbr.rel (%p510) target = $region32
      $region31: #{bert_pos_tagger_forward.1} parent=11 // pred_region
        _
      $region32: #{bert_pos_tagger_forward.1} parent=11 // pred_fallthru
        _
      // Predicated region
      $region33: #{bert_pos_tagger_forward.1} parent=11 // pred_check
        %p513 = pneg %p462
      $region34: #{bert_pos_tagger_forward.1} parent=11 // pred_check_branch
        %515 = sbr.rel (%p513) target = $region36
      $region35: #{bert_pos_tagger_forward.1} parent=11 // pred_region
        _
      $region36: #{bert_pos_tagger_forward.1} parent=11 // pred_fallthru
        _
    $region12: #{bert_pos_tagger_forward.1} parent=5 // pred_fallthru
      _
    %p516 = scmp.lt.s32.totalorder %s24, 2
    // Predicated region
    $region37: #{bert_pos_tagger_forward.1} parent=5 // pred_check
      %p517 = pneg %p516
    $region38: #{bert_pos_tagger_forward.1} parent=5 // pred_check_branch
      %519 = sbr.rel (%p517) target = $region40
    $region39: #{bert_pos_tagger_forward.1} parent=5 // pred_region
      // Predicated region
      $region41: #{bert_pos_tagger_forward.1} parent=39 // pred_check
        %p520 = pneg %p128
      $region42: #{bert_pos_tagger_forward.1} parent=39 // pred_check_branch
        %522 = sbr.rel (%p520) target = $region44
      $region43: #{bert_pos_tagger_forward.1} parent=39 // pred_region
        %p523 = scmp.lt.s32.totalorder %s24, 1
        %s524 = scalar_select %p523, %s24, 1
        %s525 = smul.addr %s524, 4
        %s526 = smul.addr %s525, 4
        %s527 = scalar_lea.vmem %s4, %s526
      $region44: #{bert_pos_tagger_forward.1} parent=39 // pred_fallthru
        _
      // Predicated region
      $region45: #{bert_pos_tagger_forward.1} parent=39 // pred_check
        %p528 = pneg %p154
      $region46: #{bert_pos_tagger_forward.1} parent=39 // pred_check_branch
        %530 = sbr.rel (%p528) target = $region48
      $region47: #{bert_pos_tagger_forward.1} parent=39 // pred_region
        %p531 = scmp.lt.s32.totalorder %s24, 1
        %s532 = scalar_select %p531, %s24, 1
        %s533 = scalar_lea.vmem %s5, %s532
      $region48: #{bert_pos_tagger_forward.1} parent=39 // pred_fallthru
        _
      // Predicated region
      $region49: #{bert_pos_tagger_forward.1} parent=39 // pred_check
        %p534 = pneg %p180
      $region50: #{bert_pos_tagger_forward.1} parent=39 // pred_check_branch
        %536 = sbr.rel (%p534) target = $region52
      $region51: #{bert_pos_tagger_forward.1} parent=39 // pred_region
        %p537 = scmp.lt.s32.totalorder %s24, 1
        %s538 = scalar_select %p537, %s24, 1
        %s539 = smul.addr %s538, 4
        %s540 = smul.addr %s539, 4
        %s541 = scalar_lea.vmem %s6, %s540
      $region52: #{bert_pos_tagger_forward.1} parent=39 // pred_fallthru
        _
      // Predicated region
      $region53: #{bert_pos_tagger_forward.1} parent=39 // pred_check
        %p542 = pneg %p206
      $region54: #{bert_pos_tagger_forward.1} parent=39 // pred_check_branch
        %544 = sbr.rel (%p542) target = $region56
      $region55: #{bert_pos_tagger_forward.1} parent=39 // pred_region
        %p545 = scmp.lt.s32.totalorder %s24, 1
        %s546 = scalar_select %p545, %s24, 1
        %s547 = scalar_lea.vmem %s7, %s546
      $region56: #{bert_pos_tagger_forward.1} parent=39 // pred_fallthru
        _
      // Predicated region
      $region57: #{bert_pos_tagger_forward.1} parent=39 // pred_check
        %p548 = pneg %p232
      $region58: #{bert_pos_tagger_forward.1} parent=39 // pred_check_branch
        %550 = sbr.rel (%p548) target = $region60
      $region59: #{bert_pos_tagger_forward.1} parent=39 // pred_region
        %p551 = scmp.lt.s32.totalorder %s24, 1
        %s552 = scalar_select %p551, %s24, 1
        %s553 = scalar_lea.vmem %s8, %s552
      $region60: #{bert_pos_tagger_forward.1} parent=39 // pred_fallthru
        _
      // Predicated region
      $region61: #{bert_pos_tagger_forward.1} parent=39 // pred_check
        %p554 = pneg %p258
      $region62: #{bert_pos_tagger_forward.1} parent=39 // pred_check_branch
        %556 = sbr.rel (%p554) target = $region64
      $region63: #{bert_pos_tagger_forward.1} parent=39 // pred_region
        %p557 = scmp.lt.s32.totalorder %s24, 1
        %s558 = scalar_select %p557, %s24, 1
        %s559 = scalar_lea.vmem %s9, %s558
      $region64: #{bert_pos_tagger_forward.1} parent=39 // pred_fallthru
        _
      // Predicated region
      $region65: #{bert_pos_tagger_forward.1} parent=39 // pred_check
        %p560 = pneg %p284
      $region66: #{bert_pos_tagger_forward.1} parent=39 // pred_check_branch
        %562 = sbr.rel (%p560) target = $region68
      $region67: #{bert_pos_tagger_forward.1} parent=39 // pred_region
        %p563 = scmp.lt.s32.totalorder %s24, 1
        %s564 = scalar_select %p563, %s24, 1
        %s565 = smul.addr %s564, 4
        %s566 = smul.addr %s565, 4
        %s567 = scalar_lea.vmem %s10, %s566
      $region68: #{bert_pos_tagger_forward.1} parent=39 // pred_fallthru
        _
      // Predicated region
      $region69: #{bert_pos_tagger_forward.1} parent=39 // pred_check
        %p568 = pneg %p310
      $region70: #{bert_pos_tagger_forward.1} parent=39 // pred_check_branch
        %570 = sbr.rel (%p568) target = $region72
      $region71: #{bert_pos_tagger_forward.1} parent=39 // pred_region
        %p571 = scmp.lt.s32.totalorder %s24, 1
        %s572 = scalar_select %p571, %s24, 1
        %s573 = scalar_lea.vmem %s11, %s572
      $region72: #{bert_pos_tagger_forward.1} parent=39 // pred_fallthru
        _
      // Predicated region
      $region73: #{bert_pos_tagger_forward.1} parent=39 // pred_check
        %p574 = pneg %p336
      $region74: #{bert_pos_tagger_forward.1} parent=39 // pred_check_branch
        %576 = sbr.rel (%p574) target = $region76
      $region75: #{bert_pos_tagger_forward.1} parent=39 // pred_region
        %p577 = scmp.lt.s32.totalorder %s24, 1
        %s578 = scalar_select %p577, %s24, 1
        %s579 = smul.addr %s578, 8
        %s580 = smul.addr %s579, 4
        %s581 = scalar_lea.vmem %s12, %s580
      $region76: #{bert_pos_tagger_forward.1} parent=39 // pred_fallthru
        _
      // Predicated region
      $region77: #{bert_pos_tagger_forward.1} parent=39 // pred_check
        %p582 = pneg %p362
      $region78: #{bert_pos_tagger_forward.1} parent=39 // pred_check_branch
        %584 = sbr.rel (%p582) target = $region80
      $region79: #{bert_pos_tagger_forward.1} parent=39 // pred_region
        %p585 = scmp.lt.s32.totalorder %s24, 1
        %s586 = scalar_select %p585, %s24, 1
        %s587 = scalar_lea.vmem %s13, %s586
      $region80: #{bert_pos_tagger_forward.1} parent=39 // pred_fallthru
        _
      // Predicated region
      $region81: #{bert_pos_tagger_forward.1} parent=39 // pred_check
        %p588 = pneg %p388
      $region82: #{bert_pos_tagger_forward.1} parent=39 // pred_check_branch
        %590 = sbr.rel (%p588) target = $region84
      $region83: #{bert_pos_tagger_forward.1} parent=39 // pred_region
        %p591 = scmp.lt.s32.totalorder %s24, 1
        %s592 = scalar_select %p591, %s24, 1
        %s593 = scalar_lea.vmem %s14, %s592
      $region84: #{bert_pos_tagger_forward.1} parent=39 // pred_fallthru
        _
      // Predicated region
      $region85: #{bert_pos_tagger_forward.1} parent=39 // pred_check
        %p594 = pneg %p414
      $region86: #{bert_pos_tagger_forward.1} parent=39 // pred_check_branch
        %596 = sbr.rel (%p594) target = $region88
      $region87: #{bert_pos_tagger_forward.1} parent=39 // pred_region
        %p597 = scmp.lt.s32.totalorder %s24, 1
        %s598 = scalar_select %p597, %s24, 1
        %s599 = scalar_lea.vmem %s15, %s598
      $region88: #{bert_pos_tagger_forward.1} parent=39 // pred_fallthru
        _
    $region40: #{bert_pos_tagger_forward.1} parent=5 // pred_fallthru
      _
    %p600 = scmp.le.s32.totalorder 1, %s24
    %p601 = scmp.lt.s32.totalorder %s24, 3
    %p602 = pnand %p600, %p601
    %p603 = pneg %p602
    // Predicated region
    $region89: #{bert_pos_tagger_forward.1} parent=5 // pred_check
      _
    $region90: #{bert_pos_tagger_forward.1} parent=5 // pred_check_branch
      %605 = sbr.rel (%p602) target = $region92
    $region91: #{bert_pos_tagger_forward.1} parent=5 // pred_region
      %s606 = ssub.s32 %s24, 1
      %p607 = pneg %p45
      %p608 = pneg %p42
      %p609 = pneg %p66
      %p610 = pneg %p63
      %p611 = pneg %p87
      %p612 = pneg %p84
      %p613 = pneg %p108
      %p614 = pneg %p105
      %p615 = scmp.lt.s32.totalorder %s29, 1
      %s616 = scalar_select %p615, %s29, 1
      %s617 = smul.addr %s616, 4
      %s618 = smul.addr %s617, 4
      %s619 = scalar_lea.vmem %s4, %s618
      %p620 = pneg %p134
      %p621 = pneg %p131
      %p622 = scmp.lt.s32.totalorder %s29, 1
      %s623 = scalar_select %p622, %s29, 1
      %s624 = scalar_lea.vmem %s5, %s623
      %p625 = pneg %p160
      %p626 = pneg %p157
      %p627 = scmp.lt.s32.totalorder %s29, 1
      %s628 = scalar_select %p627, %s29, 1
      %s629 = smul.addr %s628, 4
      %s630 = smul.addr %s629, 4
      %s631 = scalar_lea.vmem %s6, %s630
      %p632 = pneg %p186
      %p633 = pneg %p183
      %p634 = scmp.lt.s32.totalorder %s29, 1
      %s635 = scalar_select %p634, %s29, 1
      %s636 = scalar_lea.vmem %s7, %s635
      %p637 = pneg %p212
      %p638 = pneg %p209
      %p639 = scmp.lt.s32.totalorder %s29, 1
      %s640 = scalar_select %p639, %s29, 1
      %s641 = scalar_lea.vmem %s8, %s640
      %p642 = pneg %p238
      %p643 = pneg %p235
      %p644 = scmp.lt.s32.totalorder %s29, 1
      %s645 = scalar_select %p644, %s29, 1
      %s646 = scalar_lea.vmem %s9, %s645
      %p647 = pneg %p264
      %p648 = pneg %p261
      %p649 = scmp.lt.s32.totalorder %s29, 1
      %s650 = scalar_select %p649, %s29, 1
      %s651 = smul.addr %s650, 4
      %s652 = smul.addr %s651, 4
      %s653 = scalar_lea.vmem %s10, %s652
      %p654 = pneg %p290
      %p655 = pneg %p287
      %p656 = scmp.lt.s32.totalorder %s29, 1
      %s657 = scalar_select %p656, %s29, 1
      %s658 = scalar_lea.vmem %s11, %s657
      %p659 = pneg %p316
      %p660 = pneg %p313
      %p661 = scmp.lt.s32.totalorder %s29, 1
      %s662 = scalar_select %p661, %s29, 1
      %s663 = smul.addr %s662, 8
      %s664 = smul.addr %s663, 4
      %s665 = scalar_lea.vmem %s12, %s664
      %p666 = pneg %p342
      %p667 = pneg %p339
      %p668 = scmp.lt.s32.totalorder %s29, 1
      %s669 = scalar_select %p668, %s29, 1
      %s670 = scalar_lea.vmem %s13, %s669
      %p671 = pneg %p368
      %p672 = pneg %p365
      %p673 = scmp.lt.s32.totalorder %s29, 1
      %s674 = scalar_select %p673, %s29, 1
      %s675 = scalar_lea.vmem %s14, %s674
      %p676 = pneg %p394
      %p677 = pneg %p391
      %p678 = scmp.lt.s32.totalorder %s29, 1
      %s679 = scalar_select %p678, %s29, 1
      %s680 = scalar_lea.vmem %s15, %s679
      %p681 = pneg %p420
      %p682 = pneg %p417
      %p683 = pneg %p441
      %p684 = pneg %p438
      %p685 = pneg %p462
      %p686 = pneg %p459
      %p687 = pneg %p483
      %p688 = pneg %p480
      %p689 = scmp.lt.s32.totalorder %s29, 1
      %s690 = scalar_select %p689, %s29, 1
      %s691 = smul.addr %s690, 4
      %s692 = smul.addr %s691, 4
      %s693 = scalar_lea.vmem %s4, %s692
      %p694 = scmp.lt.s32.totalorder %s29, 1
      %s695 = scalar_select %p694, %s29, 1
      %s696 = scalar_lea.vmem %s5, %s695
      %p697 = scmp.lt.s32.totalorder %s29, 1
      %s698 = scalar_select %p697, %s29, 1
      %s699 = smul.addr %s698, 4
      %s700 = smul.addr %s699, 4
      %s701 = scalar_lea.vmem %s6, %s700
      %p702 = scmp.lt.s32.totalorder %s29, 1
      %s703 = scalar_select %p702, %s29, 1
      %s704 = scalar_lea.vmem %s7, %s703
      %p705 = scmp.lt.s32.totalorder %s29, 1
      %s706 = scalar_select %p705, %s29, 1
      %s707 = scalar_lea.vmem %s8, %s706
      %p708 = scmp.lt.s32.totalorder %s29, 1
      %s709 = scalar_select %p708, %s29, 1
      %s710 = scalar_lea.vmem %s9, %s709
      %p711 = scmp.lt.s32.totalorder %s29, 1
      %s712 = scalar_select %p711, %s29, 1
      %s713 = smul.addr %s712, 4
      %s714 = smul.addr %s713, 4
      %s715 = scalar_lea.vmem %s10, %s714
      %p716 = scmp.lt.s32.totalorder %s29, 1
      %s717 = scalar_select %p716, %s29, 1
      %s718 = scalar_lea.vmem %s11, %s717
      %p719 = scmp.lt.s32.totalorder %s29, 1
      %s720 = scalar_select %p719, %s29, 1
      %s721 = smul.addr %s720, 8
      %s722 = smul.addr %s721, 4
      %s723 = scalar_lea.vmem %s12, %s722
      %p724 = scmp.lt.s32.totalorder %s29, 1
      %s725 = scalar_select %p724, %s29, 1
      %s726 = scalar_lea.vmem %s13, %s725
      %p727 = scmp.lt.s32.totalorder %s29, 1
      %s728 = scalar_select %p727, %s29, 1
      %s729 = scalar_lea.vmem %s14, %s728
      %p730 = scmp.lt.s32.totalorder %s29, 1
      %s731 = scalar_select %p730, %s29, 1
      %s732 = scalar_lea.vmem %s15, %s731
      %p734 = scmp.eq.s32.totalorder %s29, 0
      // Predicated region
      $region93: #{bert_pos_tagger_forward.1} parent=91 // pred_check
        %p735 = pneg %p734
      $region94: #{bert_pos_tagger_forward.1} parent=91 // pred_check_branch
        %737 = sbr.rel (%p735) target = $region96
      $region95: #{bert_pos_tagger_forward.1} parent=91 // pred_region
        %v738 = vld [vmem:[%s0] sm:$0xff]
        %v739 = vld [vmem:[%s0 + $0x8] sm:$0xff]
        %v740 = vld [vmem:[%s2] sm:$0x1]
        %v741 = vld [vmem:[%s3] sm:$0x1]
        %vm742 = vcmask 261120
        %v743 = vsel %vm742, %v738, 0.0
        %744 = vadd.xlane.f32.xlu0 %v743
        %v745 = vpop.xlane.xlu0 %744
        %v746 = vsel %vm742, %v739, 0.0
        %747 = vadd.xlane.f32.xlu0 %v746
        %v748 = vpop.xlane.xlu0 %747
        %v749 = vrcp.pop 32.0
        %v750 = vmul.f32 %v745, %v749
        %v751 = vmul.f32 %v748, %v749
        %v752 = vsub.f32 %v738, %v750
        %v753 = vsub.f32 %v739, %v751
        %v754 = vmul.f32 %v752, %v752
        %v755 = vmul.f32 %v753, %v753
        %v756 = vsel %vm742, %v754, 0.0
        %757 = vadd.xlane.f32.xlu0 %v756
        %v758 = vpop.xlane.xlu0 %757
        %v759 = vsel %vm742, %v755, 0.0
        %760 = vadd.xlane.f32.xlu0 %v759
        %v761 = vpop.xlane.xlu0 %760
        %v762 = vmul.f32 %v758, %v749
        %v763 = vmul.f32 %v761, %v749
        %v764 = vadd.f32 %v762, 1e-12
        %v765 = vadd.f32 %v763, 1e-12
        %v766 = vrsqrt.pop %v764
        %v767 = vrsqrt.pop %v765
        %v768 = vmul.f32 %v752, %v766
        %v769 = vmul.f32 %v753, %v767
        %v771 = vlaneseq
        %v772 = vshrl.u32 %v771, 7
        %v773 = vsub.s32 0, %v772
        %v774 = vrot.slane %v740, %v773
        %v776 = vmul.f32 %v768, %v774
        %v777 = vmul.f32 %v769, %v774
        %v779 = vlaneseq
        %v780 = vshrl.u32 %v779, 7
        %v781 = vsub.s32 0, %v780
        %v782 = vrot.slane %v741, %v781
        %v784 = vadd.f32 %v776, %v782
        %v785 = vadd.f32 %v777, %v782
        %786 = vst.msk [vmem:[#allocation2] sm:$0xff] %vm742, %v784
        %787 = vst.msk [vmem:[#allocation2 + $0x8] sm:$0xff] %vm742, %v785
      $region96: #{bert_pos_tagger_forward.1} parent=91 // pred_fallthru
        _
      %v788 = vld [vmem:[#allocation2] sm:$0xff]
      %v789 = vld [vmem:[#allocation2 + $0x8] sm:$0xff]
      %v790 = vpack.c.bf16 %v789, %v788
      %v791 = vld [vmem:[%s693] sm:$0xf]
      %v792 = vld [vmem:[%s693 + $0x4] sm:$0xf]
      %v793 = vld [vmem:[%s693 + $0x8] sm:$0xf]
      %v794 = vld [vmem:[%s693 + $0xc] sm:$0xf]
      %v795 = vld [vmem:[%s696] sm:$0x1]
      %v797 = vlaneseq
      %v798 = vshrl.u32 %v797, 7
      %v799 = vsub.s32 0, %v798
      %v800 = vrot.slane %v795, %v799
      %v806 = vunpack.c.l.b16 %v791
      %v807 = vunpack.c.l.b16 %v792
      %v808 = vunpack.c.l.b16 %v793
      %v809 = vunpack.c.l.b16 %v794
      %v810 = vpack.c.b16 %v807, %v806
      %v811 = vpack.c.b16 %v809, %v808
      %vm814 = vcmask 261120
      %v816 = vsel %vm814, %v790, 0
      %818 = vmatprep.subr.bf16.mxu0 0
      %819 = vmatpush1.bf16.msra.mxu0 %v810
      %820 = vmatprep.subr.bf16.mxu0 0
      %821 = vmatpush1.bf16.msra.mxu0 %v811
      %822 = vmatprep.subr.bf16.mxu0 0
      %823 = vmatpush1.bf16.msra.mxu0 0
      %824 = vmatprep.subr.bf16.mxu0 0
      %825 = vmatpush1.bf16.msra.mxu0 0
      %826 = vmatprep.subr.bf16.mxu0 0
      %827 = vmatpush1.bf16.msra.mxu0 0
      %828 = vmatprep.subr.bf16.mxu0 0
      %829 = vmatpush1.bf16.msra.mxu0 0
      %830 = vmatprep.subr.bf16.mxu0 0
      %831 = vmatpush1.bf16.msra.mxu0 0
      %832 = vmatprep.subr.bf16.mxu0 0
      %833 = vmatpush1.bf16.msra.mxu0 0
      %834 = vmatprep.subr.bf16.mxu0 0
      %835 = vmatpush1.bf16.msra.mxu0 0
      %836 = vmatprep.subr.bf16.mxu0 0
      %837 = vmatpush1.bf16.msra.mxu0 0
      %838 = vmatprep.subr.bf16.mxu0 0
      %839 = vmatpush1.bf16.msra.mxu0 0
      %840 = vmatprep.subr.bf16.mxu0 0
      %841 = vmatpush1.bf16.msra.mxu0 0
      %842 = vmatprep.subr.bf16.mxu0 0
      %843 = vmatpush1.bf16.msra.mxu0 0
      %844 = vmatprep.subr.bf16.mxu0 0
      %845 = vmatpush1.bf16.msra.mxu0 0
      %846 = vmatprep.subr.bf16.mxu0 0
      %847 = vmatpush1.bf16.msra.mxu0 0
      %848 = vmatprep.subr.bf16.mxu0 0
      %849 = vmatpush1.bf16.msra.mxu0 0
      %850 = vmatprep.mubr.bf16.mxu0 0
      %851 = vmatmul.mubr.bf16.gmra.mrb[0].mxu0 %v816
      %v852 = vpop.f32.mrb[0].mxu0
      %v853 = vadd.f32 %v800, %v852
      %v854 = vpop.f32.mrb[0].mxu0
      %v855 = vpop.f32.mrb[0].mxu0
      %v856 = vadd.f32 %v800, %v855
      %v857 = vpop.f32.mrb[0].mxu0
      %858 = vdwg.mxu0
      %v859 = vld [vmem:[%s1] sm:$0x3]
      %v860 = vpack.c.bf16 %v853, %v853
      %v861 = vpack.c.bf16 %v856, %v856
      %863 = vrot.lane.b32.xlu0 %v860, 96
      %v864 = vpop.permute.xlu0 %863
      %vm865 = vcmask 130048
      %v867 = vsel %vm865, %v860, 0
      %v870 = vsel %vm865, %v864, 0
      %872 = vmatprep.subr.bf16.mxu0 0
      %873 = vmatpush1.bf16.xpose.msra.mxu0 %v870
      %874 = vmatprep.subr.bf16.mxu0 0
      %875 = vmatpush1.bf16.xpose.msra.mxu0 0
      %876 = vmatprep.subr.bf16.mxu0 0
      %877 = vmatpush1.bf16.xpose.msra.mxu0 0
      %878 = vmatprep.subr.bf16.mxu0 0
      %879 = vmatpush1.bf16.xpose.msra.mxu0 0
      %880 = vmatprep.subr.bf16.mxu0 0
      %881 = vmatpush1.bf16.xpose.msra.mxu0 0
      %882 = vmatprep.subr.bf16.mxu0 0
      %883 = vmatpush1.bf16.xpose.msra.mxu0 0
      %884 = vmatprep.subr.bf16.mxu0 0
      %885 = vmatpush1.bf16.xpose.msra.mxu0 0
      %886 = vmatprep.subr.bf16.mxu0 0
      %887 = vmatpush1.bf16.xpose.msra.mxu0 0
      %888 = vmatprep.subr.bf16.mxu0 0
      %889 = vmatpush1.bf16.xpose.msra.mxu0 0
      %890 = vmatprep.subr.bf16.mxu0 0
      %891 = vmatpush1.bf16.xpose.msra.mxu0 0
      %892 = vmatprep.subr.bf16.mxu0 0
      %893 = vmatpush1.bf16.xpose.msra.mxu0 0
      %894 = vmatprep.subr.bf16.mxu0 0
      %895 = vmatpush1.bf16.xpose.msra.mxu0 0
      %896 = vmatprep.subr.bf16.mxu0 0
      %897 = vmatpush1.bf16.xpose.msra.mxu0 0
      %898 = vmatprep.subr.bf16.mxu0 0
      %899 = vmatpush1.bf16.xpose.msra.mxu0 0
      %900 = vmatprep.subr.bf16.mxu0 0
      %901 = vmatpush1.bf16.xpose.msra.mxu0 0
      %902 = vmatprep.subr.bf16.mxu0 0
      %903 = vmatpush1.bf16.xpose.msra.mxu0 0
      %904 = vmatprep.mubr.bf16.mxu0 0
      %905 = vmatmul.mubr.bf16.gmra.mrb[0].mxu0 %v867
      %v906 = vpop.f32.mrb[0].mxu0
      %v907 = vadd.f32 0.0, %v906
      %v908 = vpop.f32.mrb[0].mxu0
      %v909 = vpop.f32.mrb[0].mxu0
      %v910 = vpop.f32.mrb[0].mxu0
      %911 = vdwg.mxu0
      %913 = vrot.lane.b32.xlu0 %v861, 96
      %v914 = vpop.permute.xlu0 %913
      %v916 = vsel %vm865, %v861, 0
      %v919 = vsel %vm865, %v914, 0
      %921 = vmatprep.subr.bf16.mxu0 0
      %922 = vmatpush1.bf16.xpose.msra.mxu0 %v919
      %923 = vmatprep.subr.bf16.mxu0 0
      %924 = vmatpush1.bf16.xpose.msra.mxu0 0
      %925 = vmatprep.subr.bf16.mxu0 0
      %926 = vmatpush1.bf16.xpose.msra.mxu0 0
      %927 = vmatprep.subr.bf16.mxu0 0
      %928 = vmatpush1.bf16.xpose.msra.mxu0 0
      %929 = vmatprep.subr.bf16.mxu0 0
      %930 = vmatpush1.bf16.xpose.msra.mxu0 0
      %931 = vmatprep.subr.bf16.mxu0 0
      %932 = vmatpush1.bf16.xpose.msra.mxu0 0
      %933 = vmatprep.subr.bf16.mxu0 0
      %934 = vmatpush1.bf16.xpose.msra.mxu0 0
      %935 = vmatprep.subr.bf16.mxu0 0
      %936 = vmatpush1.bf16.xpose.msra.mxu0 0
      %937 = vmatprep.subr.bf16.mxu0 0
      %938 = vmatpush1.bf16.xpose.msra.mxu0 0
      %939 = vmatprep.subr.bf16.mxu0 0
      %940 = vmatpush1.bf16.xpose.msra.mxu0 0
      %941 = vmatprep.subr.bf16.mxu0 0
      %942 = vmatpush1.bf16.xpose.msra.mxu0 0
      %943 = vmatprep.subr.bf16.mxu0 0
      %944 = vmatpush1.bf16.xpose.msra.mxu0 0
      %945 = vmatprep.subr.bf16.mxu0 0
      %946 = vmatpush1.bf16.xpose.msra.mxu0 0
      %947 = vmatprep.subr.bf16.mxu0 0
      %948 = vmatpush1.bf16.xpose.msra.mxu0 0
      %949 = vmatprep.subr.bf16.mxu0 0
      %950 = vmatpush1.bf16.xpose.msra.mxu0 0
      %951 = vmatprep.subr.bf16.mxu0 0
      %952 = vmatpush1.bf16.xpose.msra.mxu0 0
      %953 = vmatprep.mubr.bf16.mxu0 0
      %954 = vmatmul.mubr.bf16.gmra.mrb[0].mxu0 %v916
      %v955 = vpop.f32.mrb[0].mxu0
      %v956 = vadd.f32 0.0, %v955
      %v957 = vpop.f32.mrb[0].mxu0
      %v958 = vpop.f32.mrb[0].mxu0
      %v959 = vpop.f32.mrb[0].mxu0
      %960 = vdwg.mxu0
      %v961 = vmul.f32 %v907, 0.25
      %v962 = vmul.f32 %v956, 0.25
      %v965 = vunpack.c.l.s4 1966171168
      %v966 = vunpack.c.0.s8 %v965
      %v967 = vlaneseq
      %v968 = vshrl.u32 %v967, 7
      %v969 = vsub.s32 %v966, %v968
      %v970 = vrot.slane %v859, %v969
      %v971 = vcombine.high %v970, %v970
      %v973 = vunpack.c.l.s4 1966171168
      %v974 = vunpack.c.0.s8 %v973
      %v975 = vlaneseq
      %v976 = vshrl.u32 %v975, 7
      %v977 = vsub.s32 %v974, %v976
      %v978 = vrot.slane %v970, %v977
      %v980 = vunpack.c.l.s4 1966171168
      %v981 = vunpack.c.0.s8 %v980
      %v982 = vlaneseq
      %v983 = vshrl.u32 %v982, 7
      %v984 = vsub.s32 %v981, %v983
      %v985 = vrot.slane %v971, %v984
      %v986 = vlaneseq
      %v987 = vshrl.u32 %v986, 7
      %v988 = vsub.s32 0, %v987
      %v989 = vrot.slane %v978, %v988
      %v990 = vlaneseq
      %v991 = vshrl.u32 %v990, 7
      %v992 = vsub.s32 0, %v991
      %v993 = vrot.slane %v985, %v992
      %v996 = vadd.f32 %v961, %v989
      %v997 = vadd.f32 %v962, %v993
      %vm998 = vcmask 64512
      %v999 = vsel %vm998, %v996, -inf
      %1000 = vmax.xlane.f32.xlu0 %v999
      %v1001 = vpop.xlane.xlu0 %1000
      %v1002 = vsel %vm998, %v997, -inf
      %1003 = vmax.xlane.f32.xlu0 %v1002
      %v1004 = vpop.xlane.xlu0 %1003
      %v1005 = vsub.f32 %v996, %v1001
      %v1006 = vsub.f32 %v997, %v1004
      %v1007 = vmul.f32 %v1005, 1.442695
      %v1008 = vpow.pop %v1007
      %v1009 = vmul.f32 %v1006, 1.442695
      %v1010 = vpow.pop %v1009
      %v1011 = vsel %vm998, %v1008, 0.0
      %1012 = vadd.xlane.f32.xlu0 %v1011
      %v1013 = vpop.xlane.xlu0 %1012
      %v1014 = vsel %vm998, %v1010, 0.0
      %1015 = vadd.xlane.f32.xlu0 %v1014
      %v1016 = vpop.xlane.xlu0 %1015
      %v1017 = vrcp.pop %v1013
      %v1018 = vrcp.pop %v1016
      %v1019 = vmul.f32 %v1008, %v1017
      %v1020 = vmul.f32 %v1010, %v1018
      %v1021 = vpack.c.bf16 %v1019, %v1019
      %v1022 = vpack.c.bf16 %v1020, %v1020
      %1023 = vrot.lane.b32.xlu0 %v860, 64
      %v1024 = vpop.permute.xlu0 %1023
      %v1026 = vsel %vm998, %v1021, 0
      %vm1028 = vcmask 1043456
      %v1030 = vsel %vm1028, %v1024, 0
      %1032 = vmatprep.subr.bf16.mxu0 0
      %1033 = vmatpush1.bf16.msra.mxu0 %v1030
      %1034 = vmatprep.subr.bf16.mxu0 0
      %1035 = vmatpush1.bf16.msra.mxu0 0
      %1036 = vmatprep.subr.bf16.mxu0 0
      %1037 = vmatpush1.bf16.msra.mxu0 0
      %1038 = vmatprep.subr.bf16.mxu0 0
      %1039 = vmatpush1.bf16.msra.mxu0 0
      %1040 = vmatprep.subr.bf16.mxu0 0
      %1041 = vmatpush1.bf16.msra.mxu0 0
      %1042 = vmatprep.subr.bf16.mxu0 0
      %1043 = vmatpush1.bf16.msra.mxu0 0
      %1044 = vmatprep.subr.bf16.mxu0 0
      %1045 = vmatpush1.bf16.msra.mxu0 0
      %1046 = vmatprep.subr.bf16.mxu0 0
      %1047 = vmatpush1.bf16.msra.mxu0 0
      %1048 = vmatprep.subr.bf16.mxu0 0
      %1049 = vmatpush1.bf16.msra.mxu0 0
      %1050 = vmatprep.subr.bf16.mxu0 0
      %1051 = vmatpush1.bf16.msra.mxu0 0
      %1052 = vmatprep.subr.bf16.mxu0 0
      %1053 = vmatpush1.bf16.msra.mxu0 0
      %1054 = vmatprep.subr.bf16.mxu0 0
      %1055 = vmatpush1.bf16.msra.mxu0 0
      %1056 = vmatprep.subr.bf16.mxu0 0
      %1057 = vmatpush1.bf16.msra.mxu0 0
      %1058 = vmatprep.subr.bf16.mxu0 0
      %1059 = vmatpush1.bf16.msra.mxu0 0
      %1060 = vmatprep.subr.bf16.mxu0 0
      %1061 = vmatpush1.bf16.msra.mxu0 0
      %1062 = vmatprep.subr.bf16.mxu0 0
      %1063 = vmatpush1.bf16.msra.mxu0 0
      %1064 = vmatprep.mubr.bf16.mxu0 0
      %1065 = vmatmul.mubr.bf16.gmra.mrb[0].mxu0 %v1026
      %v1066 = vpop.f32.mrb[0].mxu0
      %v1067 = vadd.f32 0.0, %v1066
      %v1068 = vpop.f32.mrb[0].mxu0
      %v1069 = vpop.f32.mrb[0].mxu0
      %v1070 = vpop.f32.mrb[0].mxu0
      %1071 = vdwg.mxu0
      %1072 = vrot.lane.b32.xlu0 %v861, 64
      %v1073 = vpop.permute.xlu0 %1072
      %v1075 = vsel %vm998, %v1022, 0
      %v1078 = vsel %vm1028, %v1073, 0
      %1080 = vmatprep.subr.bf16.mxu0 0
      %1081 = vmatpush1.bf16.msra.mxu0 %v1078
      %1082 = vmatprep.subr.bf16.mxu0 0
      %1083 = vmatpush1.bf16.msra.mxu0 0
      %1084 = vmatprep.subr.bf16.mxu0 0
      %1085 = vmatpush1.bf16.msra.mxu0 0
      %1086 = vmatprep.subr.bf16.mxu0 0
      %1087 = vmatpush1.bf16.msra.mxu0 0
      %1088 = vmatprep.subr.bf16.mxu0 0
      %1089 = vmatpush1.bf16.msra.mxu0 0
      %1090 = vmatprep.subr.bf16.mxu0 0
      %1091 = vmatpush1.bf16.msra.mxu0 0
      %1092 = vmatprep.subr.bf16.mxu0 0
      %1093 = vmatpush1.bf16.msra.mxu0 0
      %1094 = vmatprep.subr.bf16.mxu0 0
      %1095 = vmatpush1.bf16.msra.mxu0 0
      %1096 = vmatprep.subr.bf16.mxu0 0
      %1097 = vmatpush1.bf16.msra.mxu0 0
      %1098 = vmatprep.subr.bf16.mxu0 0
      %1099 = vmatpush1.bf16.msra.mxu0 0
      %1100 = vmatprep.subr.bf16.mxu0 0
      %1101 = vmatpush1.bf16.msra.mxu0 0
      %1102 = vmatprep.subr.bf16.mxu0 0
      %1103 = vmatpush1.bf16.msra.mxu0 0
      %1104 = vmatprep.subr.bf16.mxu0 0
      %1105 = vmatpush1.bf16.msra.mxu0 0
      %1106 = vmatprep.subr.bf16.mxu0 0
      %1107 = vmatpush1.bf16.msra.mxu0 0
      %1108 = vmatprep.subr.bf16.mxu0 0
      %1109 = vmatpush1.bf16.msra.mxu0 0
      %1110 = vmatprep.subr.bf16.mxu0 0
      %1111 = vmatpush1.bf16.msra.mxu0 0
      %1112 = vmatprep.mubr.bf16.mxu0 0
      %1113 = vmatmul.mubr.bf16.gmra.mrb[0].mxu0 %v1075
      %v1114 = vpop.f32.mrb[0].mxu0
      %v1115 = vadd.f32 0.0, %v1114
      %v1116 = vpop.f32.mrb[0].mxu0
      %v1117 = vpop.f32.mrb[0].mxu0
      %v1118 = vpop.f32.mrb[0].mxu0
      %1119 = vdwg.mxu0
      %v1120 = vpack.c.bf16 %v1115, %v1067
      %v1121 = vld [vmem:[%s701] sm:$0xf]
      %v1122 = vld [vmem:[%s701 + $0x4] sm:$0xf]
      %1123 = vrot.lane.b32.xlu0 %v860, 112
      %v1124 = vpop.permute.xlu0 %1123
      %1125 = vrot.lane.b32.xlu0 %v860, 80
      %v1126 = vpop.permute.xlu0 %1125
      %v1128 = vsel %vm865, %v1124, 0
      %v1131 = vsel %vm865, %v1126, 0
      %1133 = vmatprep.subr.bf16.mxu0 0
      %1134 = vmatpush1.bf16.xpose.msra.mxu0 %v1131
      %1135 = vmatprep.subr.bf16.mxu0 0
      %1136 = vmatpush1.bf16.xpose.msra.mxu0 0
      %1137 = vmatprep.subr.bf16.mxu0 0
      %1138 = vmatpush1.bf16.xpose.msra.mxu0 0
      %1139 = vmatprep.subr.bf16.mxu0 0
      %1140 = vmatpush1.bf16.xpose.msra.mxu0 0
      %1141 = vmatprep.subr.bf16.mxu0 0
      %1142 = vmatpush1.bf16.xpose.msra.mxu0 0
      %1143 = vmatprep.subr.bf16.mxu0 0
      %1144 = vmatpush1.bf16.xpose.msra.mxu0 0
      %1145 = vmatprep.subr.bf16.mxu0 0
      %1146 = vmatpush1.bf16.xpose.msra.mxu0 0
      %1147 = vmatprep.subr.bf16.mxu0 0
      %1148 = vmatpush1.bf16.xpose.msra.mxu0 0
      %1149 = vmatprep.subr.bf16.mxu0 0
      %1150 = vmatpush1.bf16.xpose.msra.mxu0 0
      %1151 = vmatprep.subr.bf16.mxu0 0
      %1152 = vmatpush1.bf16.xpose.msra.mxu0 0
      %1153 = vmatprep.subr.bf16.mxu0 0
      %1154 = vmatpush1.bf16.xpose.msra.mxu0 0
      %1155 = vmatprep.subr.bf16.mxu0 0
      %1156 = vmatpush1.bf16.xpose.msra.mxu0 0
      %1157 = vmatprep.subr.bf16.mxu0 0
      %1158 = vmatpush1.bf16.xpose.msra.mxu0 0
      %1159 = vmatprep.subr.bf16.mxu0 0
      %1160 = vmatpush1.bf16.xpose.msra.mxu0 0
      %1161 = vmatprep.subr.bf16.mxu0 0
      %1162 = vmatpush1.bf16.xpose.msra.mxu0 0
      %1163 = vmatprep.subr.bf16.mxu0 0
      %1164 = vmatpush1.bf16.xpose.msra.mxu0 0
      %1165 = vmatprep.mubr.bf16.mxu0 0
      %1166 = vmatmul.mubr.bf16.gmra.mrb[0].mxu0 %v1128
      %v1167 = vpop.f32.mrb[0].mxu0
      %v1168 = vadd.f32 0.0, %v1167
      %v1169 = vpop.f32.mrb[0].mxu0
      %v1170 = vpop.f32.mrb[0].mxu0
      %v1171 = vpop.f32.mrb[0].mxu0
      %1172 = vdwg.mxu0
      %1173 = vrot.lane.b32.xlu0 %v861, 112
      %v1174 = vpop.permute.xlu0 %1173
      %1175 = vrot.lane.b32.xlu0 %v861, 80
      %v1176 = vpop.permute.xlu0 %1175
      %v1178 = vsel %vm865, %v1174, 0
      %v1181 = vsel %vm865, %v1176, 0
      %1183 = vmatprep.subr.bf16.mxu0 0
      %1184 = vmatpush1.bf16.xpose.msra.mxu0 %v1181
      %1185 = vmatprep.subr.bf16.mxu0 0
      %1186 = vmatpush1.bf16.xpose.msra.mxu0 0
      %1187 = vmatprep.subr.bf16.mxu0 0
      %1188 = vmatpush1.bf16.xpose.msra.mxu0 0
      %1189 = vmatprep.subr.bf16.mxu0 0
      %1190 = vmatpush1.bf16.xpose.msra.mxu0 0
      %1191 = vmatprep.subr.bf16.mxu0 0
      %1192 = vmatpush1.bf16.xpose.msra.mxu0 0
      %1193 = vmatprep.subr.bf16.mxu0 0
      %1194 = vmatpush1.bf16.xpose.msra.mxu0 0
      %1195 = vmatprep.subr.bf16.mxu0 0
      %1196 = vmatpush1.bf16.xpose.msra.mxu0 0
      %1197 = vmatprep.subr.bf16.mxu0 0
      %1198 = vmatpush1.bf16.xpose.msra.mxu0 0
      %1199 = vmatprep.subr.bf16.mxu0 0
      %1200 = vmatpush1.bf16.xpose.msra.mxu0 0
      %1201 = vmatprep.subr.bf16.mxu0 0
      %1202 = vmatpush1.bf16.xpose.msra.mxu0 0
      %1203 = vmatprep.subr.bf16.mxu0 0
      %1204 = vmatpush1.bf16.xpose.msra.mxu0 0
      %1205 = vmatprep.subr.bf16.mxu0 0
      %1206 = vmatpush1.bf16.xpose.msra.mxu0 0
      %1207 = vmatprep.subr.bf16.mxu0 0
      %1208 = vmatpush1.bf16.xpose.msra.mxu0 0
      %1209 = vmatprep.subr.bf16.mxu0 0
      %1210 = vmatpush1.bf16.xpose.msra.mxu0 0
      %1211 = vmatprep.subr.bf16.mxu0 0
      %1212 = vmatpush1.bf16.xpose.msra.mxu0 0
      %1213 = vmatprep.subr.bf16.mxu0 0
      %1214 = vmatpush1.bf16.xpose.msra.mxu0 0
      %1215 = vmatprep.mubr.bf16.mxu0 0
      %1216 = vmatmul.mubr.bf16.gmra.mrb[0].mxu0 %v1178
      %v1217 = vpop.f32.mrb[0].mxu0
      %v1218 = vadd.f32 0.0, %v1217
      %v1219 = vpop.f32.mrb[0].mxu0
      %v1220 = vpop.f32.mrb[0].mxu0
      %v1221 = vpop.f32.mrb[0].mxu0
      %1222 = vdwg.mxu0
      %v1223 = vmul.f32 %v1168, 0.25
      %v1224 = vmul.f32 %v1218, 0.25
      %v1225 = vadd.f32 %v1223, %v989
      %v1226 = vadd.f32 %v1224, %v993
      %v1227 = vsel %vm998, %v1225, -inf
      %1228 = vmax.xlane.f32.xlu0 %v1227
      %v1229 = vpop.xlane.xlu0 %1228
      %v1230 = vsel %vm998, %v1226, -inf
      %1231 = vmax.xlane.f32.xlu0 %v1230
      %v1232 = vpop.xlane.xlu0 %1231
      %v1233 = vsub.f32 %v1225, %v1229
      %v1234 = vsub.f32 %v1226, %v1232
      %v1235 = vmul.f32 %v1233, 1.442695
      %v1236 = vpow.pop %v1235
      %v1237 = vmul.f32 %v1234, 1.442695
      %v1238 = vpow.pop %v1237
      %v1239 = vsel %vm998, %v1236, 0.0
      %1240 = vadd.xlane.f32.xlu0 %v1239
      %v1241 = vpop.xlane.xlu0 %1240
      %v1242 = vsel %vm998, %v1238, 0.0
      %1243 = vadd.xlane.f32.xlu0 %v1242
      %v1244 = vpop.xlane.xlu0 %1243
      %v1245 = vrcp.pop %v1241
      %v1246 = vrcp.pop %v1244
      %v1247 = vmul.f32 %v1236, %v1245
      %v1248 = vmul.f32 %v1238, %v1246
      %v1249 = vpack.c.bf16 %v1247, %v1247
      %v1250 = vpack.c.bf16 %v1248, %v1248
      %1251 = vrot.lane.b32.xlu0 %v860, 48
      %v1252 = vpop.permute.xlu0 %1251
      %v1254 = vsel %vm998, %v1249, 0
      %v1257 = vsel %vm1028, %v1252, 0
      %1259 = vmatprep.subr.bf16.mxu0 0
      %1260 = vmatpush1.bf16.msra.mxu0 %v1257
      %1261 = vmatprep.subr.bf16.mxu0 0
      %1262 = vmatpush1.bf16.msra.mxu0 0
      %1263 = vmatprep.subr.bf16.mxu0 0
      %1264 = vmatpush1.bf16.msra.mxu0 0
      %1265 = vmatprep.subr.bf16.mxu0 0
      %1266 = vmatpush1.bf16.msra.mxu0 0
      %1267 = vmatprep.subr.bf16.mxu0 0
      %1268 = vmatpush1.bf16.msra.mxu0 0
      %1269 = vmatprep.subr.bf16.mxu0 0
      %1270 = vmatpush1.bf16.msra.mxu0 0
      %1271 = vmatprep.subr.bf16.mxu0 0
      %1272 = vmatpush1.bf16.msra.mxu0 0
      %1273 = vmatprep.subr.bf16.mxu0 0
      %1274 = vmatpush1.bf16.msra.mxu0 0
      %1275 = vmatprep.subr.bf16.mxu0 0
      %1276 = vmatpush1.bf16.msra.mxu0 0
      %1277 = vmatprep.subr.bf16.mxu0 0
      %1278 = vmatpush1.bf16.msra.mxu0 0
      %1279 = vmatprep.subr.bf16.mxu0 0
      %1280 = vmatpush1.bf16.msra.mxu0 0
      %1281 = vmatprep.subr.bf16.mxu0 0
      %1282 = vmatpush1.bf16.msra.mxu0 0
      %1283 = vmatprep.subr.bf16.mxu0 0
      %1284 = vmatpush1.bf16.msra.mxu0 0
      %1285 = vmatprep.subr.bf16.mxu0 0
      %1286 = vmatpush1.bf16.msra.mxu0 0
      %1287 = vmatprep.subr.bf16.mxu0 0
      %1288 = vmatpush1.bf16.msra.mxu0 0
      %1289 = vmatprep.subr.bf16.mxu0 0
      %1290 = vmatpush1.bf16.msra.mxu0 0
      %1291 = vmatprep.mubr.bf16.mxu0 0
      %1292 = vmatmul.mubr.bf16.gmra.mrb[0].mxu0 %v1254
      %v1293 = vpop.f32.mrb[0].mxu0
      %v1294 = vadd.f32 0.0, %v1293
      %v1295 = vpop.f32.mrb[0].mxu0
      %v1296 = vpop.f32.mrb[0].mxu0
      %v1297 = vpop.f32.mrb[0].mxu0
      %1298 = vdwg.mxu0
      %1299 = vrot.lane.b32.xlu0 %v861, 48
      %v1300 = vpop.permute.xlu0 %1299
      %v1302 = vsel %vm998, %v1250, 0
      %v1305 = vsel %vm1028, %v1300, 0
      %1307 = vmatprep.subr.bf16.mxu0 0
      %1308 = vmatpush1.bf16.msra.mxu0 %v1305
      %1309 = vmatprep.subr.bf16.mxu0 0
      %1310 = vmatpush1.bf16.msra.mxu0 0
      %1311 = vmatprep.subr.bf16.mxu0 0
      %1312 = vmatpush1.bf16.msra.mxu0 0
      %1313 = vmatprep.subr.bf16.mxu0 0
      %1314 = vmatpush1.bf16.msra.mxu0 0
      %1315 = vmatprep.subr.bf16.mxu0 0
      %1316 = vmatpush1.bf16.msra.mxu0 0
      %1317 = vmatprep.subr.bf16.mxu0 0
      %1318 = vmatpush1.bf16.msra.mxu0 0
      %1319 = vmatprep.subr.bf16.mxu0 0
      %1320 = vmatpush1.bf16.msra.mxu0 0
      %1321 = vmatprep.subr.bf16.mxu0 0
      %1322 = vmatpush1.bf16.msra.mxu0 0
      %1323 = vmatprep.subr.bf16.mxu0 0
      %1324 = vmatpush1.bf16.msra.mxu0 0
      %1325 = vmatprep.subr.bf16.mxu0 0
      %1326 = vmatpush1.bf16.msra.mxu0 0
      %1327 = vmatprep.subr.bf16.mxu0 0
      %1328 = vmatpush1.bf16.msra.mxu0 0
      %1329 = vmatprep.subr.bf16.mxu0 0
      %1330 = vmatpush1.bf16.msra.mxu0 0
      %1331 = vmatprep.subr.bf16.mxu0 0
      %1332 = vmatpush1.bf16.msra.mxu0 0
      %1333 = vmatprep.subr.bf16.mxu0 0
      %1334 = vmatpush1.bf16.msra.mxu0 0
      %1335 = vmatprep.subr.bf16.mxu0 0
      %1336 = vmatpush1.bf16.msra.mxu0 0
      %1337 = vmatprep.subr.bf16.mxu0 0
      %1338 = vmatpush1.bf16.msra.mxu0 0
      %1339 = vmatprep.mubr.bf16.mxu0 0
      %1340 = vmatmul.mubr.bf16.gmra.mrb[0].mxu0 %v1302
      %v1341 = vpop.f32.mrb[0].mxu0
      %v1342 = vadd.f32 0.0, %v1341
      %v1343 = vpop.f32.mrb[0].mxu0
      %v1344 = vpop.f32.mrb[0].mxu0
      %v1345 = vpop.f32.mrb[0].mxu0
      %1346 = vdwg.mxu0
      %v1347 = vpack.c.bf16 %v1342, %v1294
      %s1348 = scalar_lea.vmem %s701, 8
      %v1349 = vld [vmem:[%s1348] sm:$0xf]
      %v1350 = vld [vmem:[%s1348 + $0x4] sm:$0xf]
      %v1353 = vunpack.c.l.b16 %v1349
      %v1354 = vunpack.c.l.b16 %v1350
      %v1355 = vpack.c.b16 %v1354, %v1353
      %v1358 = vsel %vm865, %v1347, 0
      %1360 = vmatprep.subr.bf16.mxu0 0
      %1361 = vmatpush1.bf16.msra.mxu0 %v1355
      %1362 = vmatprep.subr.bf16.mxu0 0
      %1363 = vmatpush1.bf16.msra.mxu0 0
      %1364 = vmatprep.subr.bf16.mxu0 0
      %1365 = vmatpush1.bf16.msra.mxu0 0
      %1366 = vmatprep.subr.bf16.mxu0 0
      %1367 = vmatpush1.bf16.msra.mxu0 0
      %1368 = vmatprep.subr.bf16.mxu0 0
      %1369 = vmatpush1.bf16.msra.mxu0 0
      %1370 = vmatprep.subr.bf16.mxu0 0
      %1371 = vmatpush1.bf16.msra.mxu0 0
      %1372 = vmatprep.subr.bf16.mxu0 0
      %1373 = vmatpush1.bf16.msra.mxu0 0
      %1374 = vmatprep.subr.bf16.mxu0 0
      %1375 = vmatpush1.bf16.msra.mxu0 0
      %1376 = vmatprep.subr.bf16.mxu0 0
      %1377 = vmatpush1.bf16.msra.mxu0 0
      %1378 = vmatprep.subr.bf16.mxu0 0
      %1379 = vmatpush1.bf16.msra.mxu0 0
      %1380 = vmatprep.subr.bf16.mxu0 0
      %1381 = vmatpush1.bf16.msra.mxu0 0
      %1382 = vmatprep.subr.bf16.mxu0 0
      %1383 = vmatpush1.bf16.msra.mxu0 0
      %1384 = vmatprep.subr.bf16.mxu0 0
      %1385 = vmatpush1.bf16.msra.mxu0 0
      %1386 = vmatprep.subr.bf16.mxu0 0
      %1387 = vmatpush1.bf16.msra.mxu0 0
      %1388 = vmatprep.subr.bf16.mxu0 0
      %1389 = vmatpush1.bf16.msra.mxu0 0
      %1390 = vmatprep.subr.bf16.mxu0 0
      %1391 = vmatpush1.bf16.msra.mxu0 0
      %1392 = vmatprep.mubr.bf16.mxu0 0
      %1393 = vmatmul.mubr.bf16.gmra.mrb[0].mxu0 %v1358
      %v1394 = vpop.f32.mrb[0].mxu0
      %v1395 = vadd.f32 0.0, %v1394
      %v1396 = vpop.f32.mrb[0].mxu0
      %v1397 = vpop.f32.mrb[0].mxu0
      %v1398 = vadd.f32 0.0, %v1397
      %v1399 = vpop.f32.mrb[0].mxu0
      %1400 = vdwg.mxu0
      %v1403 = vunpack.c.l.b16 %v1121
      %v1404 = vunpack.c.l.b16 %v1122
      %v1405 = vpack.c.b16 %v1404, %v1403
      %v1408 = vsel %vm865, %v1120, 0
      %1410 = vmatprep.subr.bf16.mxu0 0
      %1411 = vmatpush1.bf16.msra.mxu0 %v1405
      %1412 = vmatprep.subr.bf16.mxu0 0
      %1413 = vmatpush1.bf16.msra.mxu0 0
      %1414 = vmatprep.subr.bf16.mxu0 0
      %1415 = vmatpush1.bf16.msra.mxu0 0
      %1416 = vmatprep.subr.bf16.mxu0 0
      %1417 = vmatpush1.bf16.msra.mxu0 0
      %1418 = vmatprep.subr.bf16.mxu0 0
      %1419 = vmatpush1.bf16.msra.mxu0 0
      %1420 = vmatprep.subr.bf16.mxu0 0
      %1421 = vmatpush1.bf16.msra.mxu0 0
      %1422 = vmatprep.subr.bf16.mxu0 0
      %1423 = vmatpush1.bf16.msra.mxu0 0
      %1424 = vmatprep.subr.bf16.mxu0 0
      %1425 = vmatpush1.bf16.msra.mxu0 0
      %1426 = vmatprep.subr.bf16.mxu0 0
      %1427 = vmatpush1.bf16.msra.mxu0 0
      %1428 = vmatprep.subr.bf16.mxu0 0
      %1429 = vmatpush1.bf16.msra.mxu0 0
      %1430 = vmatprep.subr.bf16.mxu0 0
      %1431 = vmatpush1.bf16.msra.mxu0 0
      %1432 = vmatprep.subr.bf16.mxu0 0
      %1433 = vmatpush1.bf16.msra.mxu0 0
      %1434 = vmatprep.subr.bf16.mxu0 0
      %1435 = vmatpush1.bf16.msra.mxu0 0
      %1436 = vmatprep.subr.bf16.mxu0 0
      %1437 = vmatpush1.bf16.msra.mxu0 0
      %1438 = vmatprep.subr.bf16.mxu0 0
      %1439 = vmatpush1.bf16.msra.mxu0 0
      %1440 = vmatprep.subr.bf16.mxu0 0
      %1441 = vmatpush1.bf16.msra.mxu0 0
      %1442 = vmatprep.mubr.bf16.mxu0 0
      %1443 = vmatmul.mubr.bf16.gmra.mrb[0].mxu0 %v1408
      %v1444 = vpop.f32.mrb[0].mxu0
      %v1445 = vadd.f32 %v1395, %v1444
      %v1446 = vpop.f32.mrb[0].mxu0
      %v1447 = vpop.f32.mrb[0].mxu0
      %v1448 = vadd.f32 %v1398, %v1447
      %v1449 = vpop.f32.mrb[0].mxu0
      %1450 = vdwg.mxu0
      %v1451 = vld [vmem:[%s704] sm:$0x1]
      %v1453 = vlaneseq
      %v1454 = vshrl.u32 %v1453, 7
      %v1455 = vsub.s32 0, %v1454
      %v1456 = vrot.slane %v1451, %v1455
      %v1458 = vadd.f32 %v1445, %v1456
      %v1459 = vadd.f32 %v1448, %v1456
      %v1460 = vadd.f32 %v1458, %v788
      %v1461 = vadd.f32 %v1459, %v789
      %v1462 = vld [vmem:[%s707] sm:$0x1]
      %v1463 = vld [vmem:[%s710] sm:$0x1]
      %v1464 = vsel %vm814, %v1460, 0.0
      %1465 = vadd.xlane.f32.xlu0 %v1464
      %v1466 = vpop.xlane.xlu0 %1465
      %v1467 = vsel %vm814, %v1461, 0.0
      %1468 = vadd.xlane.f32.xlu0 %v1467
      %v1469 = vpop.xlane.xlu0 %1468
      %v1470 = vrcp.pop 32.0
      %v1471 = vmul.f32 %v1466, %v1470
      %v1472 = vmul.f32 %v1469, %v1470
      %v1473 = vsub.f32 %v1460, %v1471
      %v1474 = vsub.f32 %v1461, %v1472
      %v1475 = vmul.f32 %v1473, %v1473
      %v1476 = vmul.f32 %v1474, %v1474
      %v1477 = vsel %vm814, %v1475, 0.0
      %1478 = vadd.xlane.f32.xlu0 %v1477
      %v1479 = vpop.xlane.xlu0 %1478
      %v1480 = vsel %vm814, %v1476, 0.0
      %1481 = vadd.xlane.f32.xlu0 %v1480
      %v1482 = vpop.xlane.xlu0 %1481
      %v1483 = vmul.f32 %v1479, %v1470
      %v1484 = vmul.f32 %v1482, %v1470
      %v1485 = vadd.f32 %v1483, 1e-12
      %v1486 = vadd.f32 %v1484, 1e-12
      %v1487 = vrsqrt.pop %v1485
      %v1488 = vrsqrt.pop %v1486
      %v1489 = vmul.f32 %v1473, %v1487
      %v1490 = vmul.f32 %v1474, %v1488
      %v1492 = vlaneseq
      %v1493 = vshrl.u32 %v1492, 7
      %v1494 = vsub.s32 0, %v1493
      %v1495 = vrot.slane %v1462, %v1494
      %v1497 = vmul.f32 %v1489, %v1495
      %v1498 = vmul.f32 %v1490, %v1495
      %v1500 = vlaneseq
      %v1501 = vshrl.u32 %v1500, 7
      %v1502 = vsub.s32 0, %v1501
      %v1503 = vrot.slane %v1463, %v1502
      %v1505 = vadd.f32 %v1497, %v1503
      %v1506 = vadd.f32 %v1498, %v1503
      %v1507 = vpack.c.bf16 %v1506, %v1505
      %v1508 = vld [vmem:[%s715] sm:$0xf]
      %v1509 = vld [vmem:[%s715 + $0x4] sm:$0xf]
      %v1510 = vld [vmem:[%s715 + $0x8] sm:$0xf]
      %v1511 = vld [vmem:[%s715 + $0xc] sm:$0xf]
      %v1512 = vld [vmem:[%s718] sm:$0x1]
      %v1514 = vlaneseq
      %v1515 = vshrl.u32 %v1514, 7
      %v1516 = vsub.s32 0, %v1515
      %v1517 = vrot.slane %v1512, %v1516
      %v1523 = vunpack.c.l.b16 %v1508
      %v1524 = vunpack.c.l.b16 %v1509
      %v1525 = vunpack.c.l.b16 %v1510
      %v1526 = vunpack.c.l.b16 %v1511
      %v1527 = vpack.c.b16 %v1524, %v1523
      %v1528 = vpack.c.b16 %v1526, %v1525
      %v1532 = vsel %vm814, %v1507, 0
      %1534 = vmatprep.subr.bf16.mxu0 0
      %1535 = vmatpush1.bf16.msra.mxu0 %v1527
      %1536 = vmatprep.subr.bf16.mxu0 0
      %1537 = vmatpush1.bf16.msra.mxu0 %v1528
      %1538 = vmatprep.subr.bf16.mxu0 0
      %1539 = vmatpush1.bf16.msra.mxu0 0
      %1540 = vmatprep.subr.bf16.mxu0 0
      %1541 = vmatpush1.bf16.msra.mxu0 0
      %1542 = vmatprep.subr.bf16.mxu0 0
      %1543 = vmatpush1.bf16.msra.mxu0 0
      %1544 = vmatprep.subr.bf16.mxu0 0
      %1545 = vmatpush1.bf16.msra.mxu0 0
      %1546 = vmatprep.subr.bf16.mxu0 0
      %1547 = vmatpush1.bf16.msra.mxu0 0
      %1548 = vmatprep.subr.bf16.mxu0 0
      %1549 = vmatpush1.bf16.msra.mxu0 0
      %1550 = vmatprep.subr.bf16.mxu0 0
      %1551 = vmatpush1.bf16.msra.mxu0 0
      %1552 = vmatprep.subr.bf16.mxu0 0
      %1553 = vmatpush1.bf16.msra.mxu0 0
      %1554 = vmatprep.subr.bf16.mxu0 0
      %1555 = vmatpush1.bf16.msra.mxu0 0
      %1556 = vmatprep.subr.bf16.mxu0 0
      %1557 = vmatpush1.bf16.msra.mxu0 0
      %1558 = vmatprep.subr.bf16.mxu0 0
      %1559 = vmatpush1.bf16.msra.mxu0 0
      %1560 = vmatprep.subr.bf16.mxu0 0
      %1561 = vmatpush1.bf16.msra.mxu0 0
      %1562 = vmatprep.subr.bf16.mxu0 0
      %1563 = vmatpush1.bf16.msra.mxu0 0
      %1564 = vmatprep.subr.bf16.mxu0 0
      %1565 = vmatpush1.bf16.msra.mxu0 0
      %1566 = vmatprep.mubr.bf16.mxu0 0
      %1567 = vmatmul.mubr.bf16.gmra.mrb[0].mxu0 %v1532
      %v1568 = vpop.f32.mrb[0].mxu0
      %v1569 = vadd.f32 %v1517, %v1568
      %v1570 = vpop.f32.mrb[0].mxu0
      %v1571 = vpop.f32.mrb[0].mxu0
      %v1572 = vadd.f32 %v1517, %v1571
      %v1573 = vpop.f32.mrb[0].mxu0
      %1574 = vdwg.mxu0
      %v1575 = vmul.f32 %v1569, 0.5
      %v1576 = vmul.f32 %v1572, 0.5
      %v1577 = vmul.f32 %v1569, 0.044715
      %v1578 = vmul.f32 %v1572, 0.044715
      %v1579 = vmul.f32 %v1577, %v1569
      %v1580 = vmul.f32 %v1578, %v1572
      %v1581 = vmul.f32 %v1579, %v1569
      %v1582 = vmul.f32 %v1580, %v1572
      %v1583 = vadd.f32 %v1569, %v1581
      %v1584 = vadd.f32 %v1572, %v1582
      %v1585 = vmul.f32 %v1583, 0.7978846
      %v1586 = vmul.f32 %v1584, 0.7978846
      %v1587 = vtanh.pop %v1585
      %v1588 = vtanh.pop %v1586
      %v1589 = vadd.f32 %v1587, 1.0
      %v1590 = vadd.f32 %v1588, 1.0
      %v1591 = vmul.f32 %v1575, %v1589
      %v1592 = vmul.f32 %v1576, %v1590
      %v1593 = vpack.c.bf16 %v1592, %v1591
      %v1594 = vld [vmem:[%s723] sm:$0xf]
      %v1595 = vld [vmem:[%s723 + $0x4] sm:$0xf]
      %v1596 = vld [vmem:[%s723 + $0x8] sm:$0xf]
      %v1597 = vld [vmem:[%s723 + $0xc] sm:$0xf]
      %v1598 = vld [vmem:[%s723 + $0x10] sm:$0xf]
      %v1599 = vld [vmem:[%s723 + $0x14] sm:$0xf]
      %v1600 = vld [vmem:[%s723 + $0x18] sm:$0xf]
      %v1601 = vld [vmem:[%s723 + $0x1c] sm:$0xf]
      %v1602 = vld [vmem:[%s726] sm:$0x1]
      %v1604 = vlaneseq
      %v1605 = vshrl.u32 %v1604, 7
      %v1606 = vsub.s32 0, %v1605
      %v1607 = vrot.slane %v1602, %v1606
      %v1617 = vunpack.c.l.b16 %v1594
      %v1618 = vunpack.c.l.b16 %v1595
      %v1619 = vunpack.c.l.b16 %v1596
      %v1620 = vunpack.c.l.b16 %v1597
      %v1621 = vunpack.c.l.b16 %v1598
      %v1622 = vunpack.c.l.b16 %v1599
      %v1623 = vunpack.c.l.b16 %v1600
      %v1624 = vunpack.c.l.b16 %v1601
      %v1625 = vpack.c.b16 %v1618, %v1617
      %v1626 = vpack.c.b16 %v1620, %v1619
      %v1627 = vpack.c.b16 %v1622, %v1621
      %v1628 = vpack.c.b16 %v1624, %v1623
      %vm1633 = vcmask 523264
      %v1635 = vsel %vm1633, %v1593, 0
      %1637 = vmatprep.subr.bf16.mxu0 0
      %1638 = vmatpush1.bf16.msra.mxu0 %v1625
      %1639 = vmatprep.subr.bf16.mxu0 0
      %1640 = vmatpush1.bf16.msra.mxu0 %v1626
      %1641 = vmatprep.subr.bf16.mxu0 0
      %1642 = vmatpush1.bf16.msra.mxu0 %v1627
      %1643 = vmatprep.subr.bf16.mxu0 0
      %1644 = vmatpush1.bf16.msra.mxu0 %v1628
      %1645 = vmatprep.subr.bf16.mxu0 0
      %1646 = vmatpush1.bf16.msra.mxu0 0
      %1647 = vmatprep.subr.bf16.mxu0 0
      %1648 = vmatpush1.bf16.msra.mxu0 0
      %1649 = vmatprep.subr.bf16.mxu0 0
      %1650 = vmatpush1.bf16.msra.mxu0 0
      %1651 = vmatprep.subr.bf16.mxu0 0
      %1652 = vmatpush1.bf16.msra.mxu0 0
      %1653 = vmatprep.subr.bf16.mxu0 0
      %1654 = vmatpush1.bf16.msra.mxu0 0
      %1655 = vmatprep.subr.bf16.mxu0 0
      %1656 = vmatpush1.bf16.msra.mxu0 0
      %1657 = vmatprep.subr.bf16.mxu0 0
      %1658 = vmatpush1.bf16.msra.mxu0 0
      %1659 = vmatprep.subr.bf16.mxu0 0
      %1660 = vmatpush1.bf16.msra.mxu0 0
      %1661 = vmatprep.subr.bf16.mxu0 0
      %1662 = vmatpush1.bf16.msra.mxu0 0
      %1663 = vmatprep.subr.bf16.mxu0 0
      %1664 = vmatpush1.bf16.msra.mxu0 0
      %1665 = vmatprep.subr.bf16.mxu0 0
      %1666 = vmatpush1.bf16.msra.mxu0 0
      %1667 = vmatprep.subr.bf16.mxu0 0
      %1668 = vmatpush1.bf16.msra.mxu0 0
      %1669 = vmatprep.mubr.bf16.mxu0 0
      %1670 = vmatmul.mubr.bf16.gmra.mrb[0].mxu0 %v1635
      %v1671 = vpop.f32.mrb[0].mxu0
      %v1672 = vadd.f32 %v1607, %v1671
      %v1673 = vpop.f32.mrb[0].mxu0
      %v1674 = vpop.f32.mrb[0].mxu0
      %v1675 = vadd.f32 %v1607, %v1674
      %v1676 = vpop.f32.mrb[0].mxu0
      %1677 = vdwg.mxu0
      %v1678 = vadd.f32 %v1672, %v1505
      %v1679 = vadd.f32 %v1675, %v1506
      %v1680 = vld [vmem:[%s729] sm:$0x1]
      %v1681 = vld [vmem:[%s732] sm:$0x1]
      %v1682 = vsel %vm814, %v1678, 0.0
      %1683 = vadd.xlane.f32.xlu0 %v1682
      %v1684 = vpop.xlane.xlu0 %1683
      %v1685 = vsel %vm814, %v1679, 0.0
      %1686 = vadd.xlane.f32.xlu0 %v1685
      %v1687 = vpop.xlane.xlu0 %1686
      %v1688 = vmul.f32 %v1684, %v1470
      %v1689 = vmul.f32 %v1687, %v1470
      %v1690 = vsub.f32 %v1678, %v1688
      %v1691 = vsub.f32 %v1679, %v1689
      %v1692 = vmul.f32 %v1690, %v1690
      %v1693 = vmul.f32 %v1691, %v1691
      %v1694 = vsel %vm814, %v1692, 0.0
      %1695 = vadd.xlane.f32.xlu0 %v1694
      %v1696 = vpop.xlane.xlu0 %1695
      %v1697 = vsel %vm814, %v1693, 0.0
      %1698 = vadd.xlane.f32.xlu0 %v1697
      %v1699 = vpop.xlane.xlu0 %1698
      %v1700 = vmul.f32 %v1696, %v1470
      %v1701 = vmul.f32 %v1699, %v1470
      %v1702 = vadd.f32 %v1700, 1e-12
      %v1703 = vadd.f32 %v1701, 1e-12
      %v1704 = vrsqrt.pop %v1702
      %v1705 = vrsqrt.pop %v1703
      %v1706 = vmul.f32 %v1690, %v1704
      %v1707 = vmul.f32 %v1691, %v1705
      %v1709 = vlaneseq
      %v1710 = vshrl.u32 %v1709, 7
      %v1711 = vsub.s32 0, %v1710
      %v1712 = vrot.slane %v1680, %v1711
      %v1714 = vmul.f32 %v1706, %v1712
      %v1715 = vmul.f32 %v1707, %v1712
      %v1717 = vlaneseq
      %v1718 = vshrl.u32 %v1717, 7
      %v1719 = vsub.s32 0, %v1718
      %v1720 = vrot.slane %v1681, %v1719
      %v1722 = vadd.f32 %v1714, %v1720
      %v1723 = vadd.f32 %v1715, %v1720
      %1724 = vst.msk [vmem:[#allocation2] sm:$0xff] %vm814, %v1722
      %1725 = vst.msk [vmem:[#allocation2 + $0x8] sm:$0xff] %vm814, %v1723
      %p1726 = scmp.eq.s32.totalorder %s29, 1
      // Predicated region
      $region97: #{bert_pos_tagger_forward.1} parent=91 // pred_check
        %p1727 = pneg %p1726
      $region98: #{bert_pos_tagger_forward.1} parent=91 // pred_check_branch
        %1729 = sbr.rel (%p1727) target = $region100
      $region99: #{bert_pos_tagger_forward.1} parent=91 // pred_region
        %v1730 = vpack.c.bf16 %v1723, %v1722
        %v1731 = vld [vmem:[%s16] sm:$0xf]
        %v1732 = vld [vmem:[%s16 + $0x4] sm:$0xf]
        %v1733 = vld [vmem:[%s16 + $0x8] sm:$0xf]
        %v1734 = vld [vmem:[%s16 + $0xc] sm:$0xf]
        %v1735 = vld [vmem:[%s17] sm:$0x1]
        %v1737 = vlaneseq
        %v1738 = vshrl.u32 %v1737, 7
        %v1739 = vsub.s32 0, %v1738
        %v1740 = vrot.slane %v1735, %v1739
        %v1746 = vunpack.c.l.b16 %v1731
        %v1747 = vunpack.c.l.b16 %v1732
        %v1748 = vunpack.c.l.b16 %v1733
        %v1749 = vunpack.c.l.b16 %v1734
        %v1750 = vpack.c.b16 %v1747, %v1746
        %v1751 = vpack.c.b16 %v1749, %v1748
        %v1755 = vsel %vm814, %v1730, 0
        %1757 = vmatprep.subr.bf16.mxu0 0
        %1758 = vmatpush1.bf16.msra.mxu0 %v1750
        %1759 = vmatprep.subr.bf16.mxu0 0
        %1760 = vmatpush1.bf16.msra.mxu0 %v1751
        %1761 = vmatprep.subr.bf16.mxu0 0
        %1762 = vmatpush1.bf16.msra.mxu0 0
        %1763 = vmatprep.subr.bf16.mxu0 0
        %1764 = vmatpush1.bf16.msra.mxu0 0
        %1765 = vmatprep.subr.bf16.mxu0 0
        %1766 = vmatpush1.bf16.msra.mxu0 0
        %1767 = vmatprep.subr.bf16.mxu0 0
        %1768 = vmatpush1.bf16.msra.mxu0 0
        %1769 = vmatprep.subr.bf16.mxu0 0
        %1770 = vmatpush1.bf16.msra.mxu0 0
        %1771 = vmatprep.subr.bf16.mxu0 0
        %1772 = vmatpush1.bf16.msra.mxu0 0
        %1773 = vmatprep.subr.bf16.mxu0 0
        %1774 = vmatpush1.bf16.msra.mxu0 0
        %1775 = vmatprep.subr.bf16.mxu0 0
        %1776 = vmatpush1.bf16.msra.mxu0 0
        %1777 = vmatprep.subr.bf16.mxu0 0
        %1778 = vmatpush1.bf16.msra.mxu0 0
        %1779 = vmatprep.subr.bf16.mxu0 0
        %1780 = vmatpush1.bf16.msra.mxu0 0
        %1781 = vmatprep.subr.bf16.mxu0 0
        %1782 = vmatpush1.bf16.msra.mxu0 0
        %1783 = vmatprep.subr.bf16.mxu0 0
        %1784 = vmatpush1.bf16.msra.mxu0 0
        %1785 = vmatprep.subr.bf16.mxu0 0
        %1786 = vmatpush1.bf16.msra.mxu0 0
        %1787 = vmatprep.subr.bf16.mxu0 0
        %1788 = vmatpush1.bf16.msra.mxu0 0
        %1789 = vmatprep.mubr.bf16.mxu0 0
        %1790 = vmatmul.mubr.bf16.gmra.mrb[0].mxu0 %v1755
        %v1791 = vpop.f32.mrb[0].mxu0
        %v1792 = vadd.f32 %v1740, %v1791
        %v1793 = vpop.f32.mrb[0].mxu0
        %v1794 = vpop.f32.mrb[0].mxu0
        %v1795 = vadd.f32 %v1740, %v1794
        %v1796 = vpop.f32.mrb[0].mxu0
        %1797 = vdwg.mxu0
        %1798 = vst [vmem:[%s18] sm:$0xff] %v1792
        %1799 = vst [vmem:[%s18 + $0x8] sm:$0xff] %v1795
      $region100: #{bert_pos_tagger_forward.1} parent=91 // pred_fallthru
        _
      // Predicated region
      $region101: #{bert_pos_tagger_forward.1} parent=91 // pred_check
        %p1800 = pneg %p480
      $region102: #{bert_pos_tagger_forward.1} parent=91 // pred_check_branch
        %1802 = sbr.rel (%p1800) target = $region104
      $region103: #{bert_pos_tagger_forward.1} parent=91 // pred_region
        _
      $region104: #{bert_pos_tagger_forward.1} parent=91 // pred_fallthru
        _
      // Predicated region
      $region105: #{bert_pos_tagger_forward.1} parent=91 // pred_check
        %p1803 = pneg %p480
      $region106: #{bert_pos_tagger_forward.1} parent=91 // pred_check_branch
        %1805 = sbr.rel (%p1803) target = $region108
      $region107: #{bert_pos_tagger_forward.1} parent=91 // pred_region
        _
      $region108: #{bert_pos_tagger_forward.1} parent=91 // pred_fallthru
        _
    $region92: #{bert_pos_tagger_forward.1} parent=5 // pred_fallthru
      _
    %p1806 = scmp.le.s32.totalorder 2, %s24
    // Predicated region
    $region109: #{bert_pos_tagger_forward.1} parent=5 // pred_check
      %p1807 = pneg %p1806
    $region110: #{bert_pos_tagger_forward.1} parent=5 // pred_check_branch
      %1809 = sbr.rel (%p1807) target = $region112
    $region111: #{bert_pos_tagger_forward.1} parent=5 // pred_region
      %s1810 = ssub.s32 %s24, 2
    $region112: #{bert_pos_tagger_forward.1} parent=5 // pred_fallthru
      _
  $region6: #{bert_pos_tagger_forward.1} parent=0 // loop_footer
    %s28 = sadd.s32 1, %s24
  $region7: #{bert_pos_tagger_forward.1} parent=0 // loop_footer_branch
    %23 = sbr.rel target = $region3
  $region8: #{bert_pos_tagger_forward.1} parent=0 // loop_exit
    _

</llo_original>
